<compile_context>
chip_gen: v6e
topology: v6e:2x2x1
jax: 0.10.0
libtpu: 0.0.40
codegen_flags: <defaults>
</compile_context>

<pallas_src>
import functools

import jax
import jax.numpy as jnp
import numpy as np
from jax import lax
from jax.experimental import pallas as pl
from jax.experimental.pallas import tpu as pltpu


# ----------------------- Kernel 1: RMSNorm + lane-padded router gate -----------------------

def rmsnorm_gate_kernel(x_ref, nw_ref, gw_ref, xn_ref, logits_ref, *, eps):
    x = x_ref[...].astype(jnp.float32)
    var = jnp.mean(x * x, axis=-1, keepdims=True)
    xn = x * lax.rsqrt(var + eps) * nw_ref[...].astype(jnp.float32)
    xn_ref[...] = xn.astype(xn_ref.dtype)
    # Gate matmul from the f32 normed activations.  gw is pre-padded to a 128-lane
    # multiple in the wrapper -> unmasked stores, full-width MXU tile.
    logits_ref[...] = jnp.dot(xn, gw_ref[...].astype(jnp.float32),
                              preferred_element_type=jnp.float32)


# ----------------------------- Kernel 2: MoE expert accumulation --------------------------

def moe_expert_kernel(xn_ref, rw_ref, w1_ref, w3_ref, w2_ref, out_ref,
                      acc_ref, part_ref):
    e = pl.program_id(1)
    i = pl.program_id(2)
    last_e = pl.num_programs(1) - 1
    last_i = pl.num_programs(2) - 1

    @pl.when(jnp.logical_and(e == 0, i == 0))
    def _():
        acc_ref[...] = jnp.zeros_like(acc_ref)          # per-token-tile output acc

    @pl.when(i == 0)
    def _():
        part_ref[...] = jnp.zeros_like(part_ref)        # per-expert partial acc

    x = xn_ref[...]                                      # (tT, H), hidden dtype
    # Gate / up projections for this I-chunk (MXU, f32 accumulation).
    g = jnp.dot(x, w1_ref[...], preferred_element_type=jnp.float32)   # (tT, tI)
    u = jnp.dot(x, w3_ref[...], preferred_element_type=jnp.float32)   # (tT, tI)
    h = (g * jax.nn.sigmoid(g)) * u                      # SiLU is elementwise in I
    # Partial down projection for this I-chunk, accumulated in f32 (unscaled).
    part_ref[...] += jnp.dot(h.astype(x.dtype), w2_ref[...],
                             preferred_element_type=jnp.float32)

    # Routing scale applied once per expert (two-level accumulation).  rw is the
    # pre-selected (tT, 1) f32 column for expert e -> 0 for unrouted tokens.
    @pl.when(i == last_i)
    def _():
        acc_ref[...] += rw_ref[...] * part_ref[...]

    @pl.when(jnp.logical_and(e == last_e, i == last_i))
    def _():
        out_ref[...] = acc_ref[...].astype(out_ref.dtype)


# --------------------------------------- Wrapper -------------------------------------------

def _vmem_budget_bytes():
    """~75% of physical VMEM (48 MiB on v7x/64 MiB, 96 MiB on v5e/v6e/128 MiB)."""
    cap = 64 * 1024 * 1024
    try:
        cap = int(getattr(pltpu.get_tpu_info(), "vmem_capacity_bytes", cap))
    except Exception:
        pass
    return (cap * 3) // 4


def _pick_tile(dim, max_tile, granularity):
    """Largest multiple of `granularity` dividing `dim`, <= max_tile; else full dim."""
    if dim <= granularity:
        return dim
    t = (min(max_tile, dim) // granularity) * granularity
    while t >= granularity:
        if dim % t == 0:
            return t
        t -= granularity
    return dim


def _estimate_vmem_bytes(tT, tI, H, dtype_bytes):
    weights = 2 * 3 * H * tI * dtype_bytes        # double-buffered w1/w3/w2 tiles
    acts = 2 * 2 * tT * H * dtype_bytes           # xn in + out, double-buffered
    routing = 2 * tT * 4                          # (tT, 1) f32 slab
    scratch = 2 * tT * H * 4                      # acc + partial (f32)
    return weights + acts + routing + scratch


def mixtral_sparse_moe(hidden_states, norm_w, gate_w, w1, w3, w2, top_k,
                       rms_eps=1e-5, token_tile=None, inter_tile=None):
    B, S, H = hidden_states.shape
    T = B * S
    E = gate_w.shape[1]
    I = w1.shape[-1]
    dtype = hidden_states.dtype
    dtype_bytes = jnp.dtype(dtype).itemsize

    vmem_budget = _vmem_budget_bytes()
    big_vmem = vmem_budget >= 80 * 1024 * 1024    # v5e/v6e (128 MiB) vs v7x (64 MiB)

    if token_tile is None:
        # Weight HBM traffic scales with T//tT (weights re-fetched per token tile):
        # maximize tT inside the VMEM budget.  Granularity 16 fills bf16 sublanes.
        tT = _pick_tile(T, 512 if big_vmem else 256, 16)
        # v7x shards the "parallel" token axis across 2 TensorCores: prefer >= 2 tiles.
        while T // tT < 2 and tT > 16 and tT % 2 == 0 and T % (tT // 2) == 0:
            tT //= 2
    else:
        tT = token_tile
    if inter_tile is None:
        tI = _pick_tile(I, 1024 if big_vmem else 512, 128)
    else:
        tI = inter_tile

    if T % tT != 0:
        raise ValueError(f"token_tile={tT} must divide T={T}")
    if I % tI != 0:
        raise ValueError(f"inter_tile={tI} must divide I={I}")
    est = _estimate_vmem_bytes(tT, tI, H, dtype_bytes)
    if est > vmem_budget:
        raise ValueError(f"tiles (tT={tT}, tI={tI}) need ~{est >> 20} MiB VMEM, "
                         f"budget {vmem_budget >> 20} MiB; choose smaller tiles")

    x2 = hidden_states.reshape(T, H)

    # Pad the tiny gate so the logits output is lane-dense (E=8 -> 128 lanes).
    E_pad = ((E + 127) // 128) * 128
    gate_w_p = jnp.pad(gate_w, ((0, 0), (0, E_pad - E)))

    # --- RMSNorm + router gate, tiled over tokens (parallel axis) ---
    xn, logits_p = pl.pallas_call(
        functools.partial(rmsnorm_gate_kernel, eps=rms_eps),
        out_shape=(jax.ShapeDtypeStruct((T, H), dtype),
                   jax.ShapeDtypeStruct((T, E_pad), jnp.float32)),
        grid_spec=pltpu.PrefetchScalarGridSpec(
            num_scalar_prefetch=0,
            grid=(T // tT,),
            in_specs=[
                pl.BlockSpec((tT, H), lambda t: (t, 0)),
                pl.BlockSpec((1, H), lambda t: (0, 0)),
                pl.BlockSpec((H, E_pad), lambda t: (0, 0)),
            ],
            out_specs=[
                pl.BlockSpec((tT, H), lambda t: (t, 0)),
                pl.BlockSpec((tT, E_pad), lambda t: (t, 0)),
            ],
        ),
        compiler_params=pltpu.CompilerParams(
            dimension_semantics=("parallel",),
            vmem_limit_bytes=vmem_budget),
    )(x2, norm_w.reshape(1, H), gate_w_p)

    router_logits = logits_p[:, :E]

    # --- Routing glue (tiny, XLA): softmax f32, top-k, renormalize, cast to the hidden
    # dtype (matches the module's routing_weights.to(hidden_states.dtype)), then
    # scatter to a dense (E, T, 1) f32 slab (0 for unrouted tokens). ---
    probs = jax.nn.softmax(router_logits, axis=-1)
    top_w, top_i = lax.top_k(probs, top_k)
    top_w = top_w / jnp.sum(top_w, axis=-1, keepdims=True)
    top_w = top_w.astype(dtype).astype(jnp.float32)            # module-exact rounding
    onehot = jax.nn.one_hot(top_i, E, dtype=jnp.float32)        # (T, k, E)
    dense_w = jnp.einsum('tk,tke->te', top_w, onehot)           # (T, E) f32
    dense_w_e = dense_w.T.reshape(E, T, 1)                      # (E, T, 1) f32

    # --- Dense-equivalent sparse MoE, grid (tokens, experts, I-chunks) ---
    grid = (T // tT, E, I // tI)
    final = pl.pallas_call(
        moe_expert_kernel,
        out_shape=jax.ShapeDtypeStruct((T, H), dtype),
        grid_spec=pltpu.PrefetchScalarGridSpec(
            num_scalar_prefetch=0,
            grid=grid,
            in_specs=[
                pl.BlockSpec((tT, H), lambda t, e, i: (t, 0)),
                pl.BlockSpec((pl.Squeezed(), tT, 1), lambda t, e, i: (e, t, 0)),
                pl.BlockSpec((pl.Squeezed(), H, tI), lambda t, e, i: (e, 0, i)),
                pl.BlockSpec((pl.Squeezed(), H, tI), lambda t, e, i: (e, 0, i)),
                pl.BlockSpec((pl.Squeezed(), tI, H), lambda t, e, i: (e, i, 0)),
            ],
            out_specs=pl.BlockSpec((tT, H), lambda t, e, i: (t, 0)),
            scratch_shapes=[pltpu.VMEM((tT, H), jnp.float32),   # output accumulator
                            pltpu.VMEM((tT, H), jnp.float32)],  # per-expert partial
        ),
        compiler_params=pltpu.CompilerParams(
            dimension_semantics=("parallel", "arbitrary", "arbitrary"),
            vmem_limit_bytes=vmem_budget),
    )(xn, dense_w_e, w1, w3, w2)

    return final.reshape(B, S, H), router_logits


# ------------------------------------ Pure-JAX reference -----------------------------------

def reference(hidden_states, norm_w, gate_w, w1, w3, w2, top_k, rms_eps=1e-5):
    B, S, H = hidden_states.shape
    T = B * S
    E = gate_w.shape[1]
    dtype = hidden_states.dtype
    x = hidden_states.reshape(T, H).astype(jnp.float32)
    var = jnp.mean(x * x, axis=-1, keepdims=True)
    xn = x * lax.rsqrt(var + rms_eps) * norm_w.astype(jnp.float32)
    logits = xn @ gate_w.astype(jnp.float32)
    probs = jax.nn.softmax(logits, axis=-1)
    top_w, top_i = lax.top_k(probs, top_k)
    top_w = top_w / jnp.sum(top_w, axis=-1, keepdims=True)
    top_w = top_w.astype(dtype).astype(jnp.float32)
    dense_w = jnp.einsum('tk,tke->te', top_w,
                         jax.nn.one_hot(top_i, E, dtype=jnp.float32))
    xn_h = xn.astype(dtype).astype(jnp.float32)   # expert path sees hidden-dtype xn
    out = jnp.zeros((T, H), jnp.float32)
    for e in range(E):
        g = xn_h @ w1[e].astype(jnp.float32)
        u = xn_h @ w3[e].astype(jnp.float32)
        h = (g * jax.nn.sigmoid(g)) * u
        o = h.astype(dtype).astype(jnp.float32) @ w2[e].astype(jnp.float32)
        out = out + dense_w[:, e:e + 1] * o
    return out.reshape(B, S, H), logits


# --------------------------------------------- main ----------------------------------------

if __name__ == "__main__":
    B, S, H = 2, 8, 128          # batch, seq, hidden
    E, K, I = 8, 2, 256          # num_experts, top_k, expert intermediate size
    dtype = jnp.bfloat16         # bf16 activations/weights, f32 MXU accumulation

    key = jax.random.PRNGKey(0)
    kx, kn, kg, k1, k3, k2 = jax.random.split(key, 6)

    x = jax.random.normal(kx, (B, S, H), jnp.float32).astype(dtype)
    norm_w = (1.0 + 0.01 * jax.random.normal(kn, (H,), jnp.float32)).astype(dtype)
    gate_w = (0.05 * jax.random.normal(kg, (H, E), jnp.float32)).astype(dtype)
    w1 = (0.05 * jax.random.normal(k1, (E, H, I), jnp.float32)).astype(dtype)
    w3 = (0.05 * jax.random.normal(k3, (E, H, I), jnp.float32)).astype(dtype)
    w2 = (0.05 * jax.random.normal(k2, (E, I, H), jnp.float32)).astype(dtype)

    ref_out, ref_logits = reference(x, norm_w, gate_w, w1, w3, w2, K, rms_eps=1e-5)

    # 1) Small explicit tiles so both the token and I-chunk grid axes are exercised.
    fn_small = jax.jit(functools.partial(mixtral_sparse_moe, top_k=K, rms_eps=1e-5,
                                         token_tile=8, inter_tile=128))
    out, logits = fn_small(x, norm_w, gate_w, w1, w3, w2)
    jax.block_until_ready((out, logits))
    np.testing.assert_allclose(np.asarray(logits, dtype=np.float32),
                               np.asarray(ref_logits, dtype=np.float32),
                               atol=2e-3, rtol=2e-3)
    np.testing.assert_allclose(np.asarray(out, dtype=np.float32),
                               np.asarray(ref_out, dtype=np.float32),
                               atol=5e-2, rtol=5e-2)

    # 2) Generation-aware default tiles / VMEM budget.
    fn_auto = jax.jit(functools.partial(mixtral_sparse_moe, top_k=K, rms_eps=1e-5))
    out2, logits2 = fn_auto(x, norm_w, gate_w, w1, w3, w2)
    jax.block_until_ready((out2, logits2))
    np.testing.assert_allclose(np.asarray(out2, dtype=np.float32),
                               np.asarray(ref_out, dtype=np.float32),
                               atol=5e-2, rtol=5e-2)

    print("KERNEL_OK")
</pallas_src>

<mosaic_0001>
module attributes {stable_mosaic.version = 11 : i64} {
  func.func @rmsnorm_gate_kernel(%arg0: i32, %arg1: memref<8x128xbf16, #tpu.memory_space<vmem>>, %arg2: memref<1x128xbf16, #tpu.memory_space<vmem>>, %arg3: memref<128x128xbf16, #tpu.memory_space<vmem>>, %arg4: memref<8x128xbf16, #tpu.memory_space<vmem>>, %arg5: memref<8x128xf32, #tpu.memory_space<vmem>>) attributes {dimension_semantics = [#tpu.dimension_semantics<parallel>], iteration_bounds = array<i64: 2>, scalar_prefetch = 0 : i64, scratch_operands = 0 : i64, tpu.core_type = #tpu.core_type<tc>, window_params = [{transform_indices = @transform_0, window_bounds = array<i64: 8, 128>}, {pipeline_mode = #tpu.pipeline_mode<synchronous>, transform_indices = @transform_1, window_bounds = array<i64: 1, 128>}, {pipeline_mode = #tpu.pipeline_mode<synchronous>, transform_indices = @transform_2, window_bounds = array<i64: 128, 128>}, {transform_indices = @transform_3, window_bounds = array<i64: 8, 128>}, {transform_indices = @transform_4, window_bounds = array<i64: 8, 128>}]} {
    %c0 = arith.constant 0 : index
    %c0_0 = arith.constant 0 : index
    %0 = vector.load %arg1[%c0, %c0_0] : memref<8x128xbf16, #tpu.memory_space<vmem>>, vector<8x128xbf16>
    %1 = arith.extf %0 : vector<8x128xbf16> to vector<8x128xf32>
    %2 = arith.mulf %1, %1 : vector<8x128xf32>
    %cst = arith.constant dense<0.000000e+00> : vector<8xf32>
    %3 = vector.multi_reduction <add>, %2, %cst [1] : vector<8x128xf32> to vector<8xf32>
    %4 = vector.shape_cast %3 : vector<8xf32> to vector<8x1xf32>
    %cst_1 = arith.constant 1.280000e+02 : f32
    %5 = vector.broadcast %cst_1 : f32 to vector<8x1xf32>
    %6 = arith.divf %4, %5 : vector<8x1xf32>
    %cst_2 = arith.constant 9.99999974E-6 : f32
    %7 = vector.broadcast %cst_2 : f32 to vector<8x1xf32>
    %8 = arith.addf %6, %7 : vector<8x1xf32>
    %9 = math.rsqrt %8 : vector<8x1xf32>
    %10 = vector.broadcast %9 : vector<8x1xf32> to vector<8x128xf32>
    %11 = arith.mulf %1, %10 : vector<8x128xf32>
    %c0_3 = arith.constant 0 : index
    %c0_4 = arith.constant 0 : index
    %12 = vector.load %arg2[%c0_3, %c0_4] : memref<1x128xbf16, #tpu.memory_space<vmem>>, vector<1x128xbf16>
    %13 = arith.extf %12 : vector<1x128xbf16> to vector<1x128xf32>
    %14 = vector.broadcast %13 : vector<1x128xf32> to vector<8x128xf32>
    %15 = arith.mulf %11, %14 : vector<8x128xf32>
    %16 = arith.truncf %15 : vector<8x128xf32> to vector<8x128xbf16>
    %c0_5 = arith.constant 0 : index
    %c0_6 = arith.constant 0 : index
    %17 = vector.load %arg4[%c0_5, %c0_6] : memref<8x128xbf16, #tpu.memory_space<vmem>>, vector<8x128xbf16>
    tpu.vector_store %arg4[%c0_5, %c0_6], %16 {strides = array<i32>} : memref<8x128xbf16, #tpu.memory_space<vmem>>, vector<8x128xbf16>,
    %c0_7 = arith.constant 0 : index
    %c0_8 = arith.constant 0 : index
    %18 = vector.load %arg3[%c0_7, %c0_8] : memref<128x128xbf16, #tpu.memory_space<vmem>>, vector<128x128xbf16>
    %19 = arith.extf %18 : vector<128x128xbf16> to vector<128x128xf32>
    %cst_9 = arith.constant dense<0.000000e+00> : vector<8x128xf32>
    %20 = tpu.matmul %15, %19, %cst_9 {dimension_numbers = #tpu.dot_dimension_numbers<[1], [0], [0], [1], [0, 0, 1, 1], [], []>} : vector<8x128xf32>, vector<128x128xf32>, vector<8x128xf32> -> vector<8x128xf32>
    %c0_10 = arith.constant 0 : index
    %c0_11 = arith.constant 0 : index
    %21 = vector.load %arg5[%c0_10, %c0_11] : memref<8x128xf32, #tpu.memory_space<vmem>>, vector<8x128xf32>
    tpu.vector_store %arg5[%c0_10, %c0_11], %20 {strides = array<i32>} : memref<8x128xf32, #tpu.memory_space<vmem>>, vector<8x128xf32>,
    return
  }
  func.func @transform_0(%arg0: i32) -> (i32, i32) {
    %c0_i32 = arith.constant 0 : i32
    %c0_i32_0 = arith.constant 0 : i32
    return %arg0, %c0_i32 : i32, i32
  }
  func.func @transform_1(%arg0: i32) -> (i32, i32) {
    %c0_i32 = arith.constant 0 : i32
    %c0_i32_0 = arith.constant 0 : i32
    %c0_i32_1 = arith.constant 0 : i32
    return %c0_i32, %c0_i32_0 : i32, i32
  }
  func.func @transform_2(%arg0: i32) -> (i32, i32) {
    %c0_i32 = arith.constant 0 : i32
    %c0_i32_0 = arith.constant 0 : i32
    %c0_i32_1 = arith.constant 0 : i32
    return %c0_i32, %c0_i32_0 : i32, i32
  }
  func.func @transform_3(%arg0: i32) -> (i32, i32) {
    %c0_i32 = arith.constant 0 : i32
    %c0_i32_0 = arith.constant 0 : i32
    return %arg0, %c0_i32 : i32, i32
  }
  func.func @transform_4(%arg0: i32) -> (i32, i32) {
    %c0_i32 = arith.constant 0 : i32
    %c0_i32_0 = arith.constant 0 : i32
    return %arg0, %c0_i32 : i32, i32
  }
}

module attributes {stable_mosaic.version = 11 : i64} {
  func.func @moe_expert_kernel(%arg0: i32, %arg1: i32, %arg2: i32, %arg3: memref<8x128xbf16, #tpu.memory_space<vmem>>, %arg4: memref<1x8x1xf32, #tpu.memory_space<vmem>>, %arg5: memref<1x128x128xbf16, #tpu.memory_space<vmem>>, %arg6: memref<1x128x128xbf16, #tpu.memory_space<vmem>>, %arg7: memref<1x128x128xbf16, #tpu.memory_space<vmem>>, %arg8: memref<8x128xbf16, #tpu.memory_space<vmem>>, %arg9: memref<8x128xf32, #tpu.memory_space<vmem>>, %arg10: memref<8x128xf32, #tpu.memory_space<vmem>>) attributes {dimension_semantics = [#tpu.dimension_semantics<parallel>, #tpu.dimension_semantics<arbitrary>, #tpu.dimension_semantics<arbitrary>], iteration_bounds = array<i64: 2, 8, 2>, scalar_prefetch = 0 : i64, scratch_operands = 2 : i64, tpu.core_type = #tpu.core_type<tc>, window_params = [{transform_indices = @transform_0, window_bounds = array<i64: 8, 128>}, {transform_indices = @transform_1, window_bounds = array<i64: 1, 8, 1>}, {transform_indices = @transform_2, window_bounds = array<i64: 1, 128, 128>}, {transform_indices = @transform_3, window_bounds = array<i64: 1, 128, 128>}, {transform_indices = @transform_4, window_bounds = array<i64: 1, 128, 128>}, {transform_indices = @transform_5, window_bounds = array<i64: 8, 128>}]} {
    %c0_i32 = arith.constant 0 : i32
    %0 = arith.cmpi eq, %arg1, %c0_i32 : i32
    %c0_i32_0 = arith.constant 0 : i32
    %1 = arith.cmpi eq, %arg2, %c0_i32_0 : i32
    %2 = arith.andi %0, %1 : i1
    %3 = arith.extui %2 : i1 to i32
    %c0_i32_1 = arith.constant 0 : i32
    %4 = arith.cmpi ne, %3, %c0_i32_1 : i32
    scf.if %4 {
      %cst_24 = arith.constant 0.000000e+00 : f32
      %37 = vector.broadcast %cst_24 : f32 to vector<8x128xf32>
      %c0_25 = arith.constant 0 : index
      %c0_26 = arith.constant 0 : index
      %38 = vector.load %arg9[%c0_25, %c0_26] : memref<8x128xf32, #tpu.memory_space<vmem>>, vector<8x128xf32>
      tpu.vector_store %arg9[%c0_25, %c0_26], %37 {strides = array<i32>} : memref<8x128xf32, #tpu.memory_space<vmem>>, vector<8x128xf32>,
    } else {
    }
    %c0_i32_2 = arith.constant 0 : i32
    %5 = arith.cmpi eq, %arg2, %c0_i32_2 : i32
    %6 = arith.extui %5 : i1 to i32
    %c0_i32_3 = arith.constant 0 : i32
    %7 = arith.cmpi ne, %6, %c0_i32_3 : i32
    scf.if %7 {
      %cst_24 = arith.constant 0.000000e+00 : f32
      %37 = vector.broadcast %cst_24 : f32 to vector<8x128xf32>
      %c0_25 = arith.constant 0 : index
      %c0_26 = arith.constant 0 : index
      %38 = vector.load %arg10[%c0_25, %c0_26] : memref<8x128xf32, #tpu.memory_space<vmem>>, vector<8x128xf32>
      tpu.vector_store %arg10[%c0_25, %c0_26], %37 {strides = array<i32>} : memref<8x128xf32, #tpu.memory_space<vmem>>, vector<8x128xf32>,
    } else {
    }
    %c0 = arith.constant 0 : index
    %c0_4 = arith.constant 0 : index
    %8 = vector.load %arg3[%c0, %c0_4] : memref<8x128xbf16, #tpu.memory_space<vmem>>, vector<8x128xbf16>
    %c0_5 = arith.constant 0 : index
    %c0_6 = arith.constant 0 : index
    %c0_7 = arith.constant 0 : index
    %9 = vector.load %arg5[%c0_5, %c0_6, %c0_7] : memref<1x128x128xbf16, #tpu.memory_space<vmem>>, vector<1x128x128xbf16>
    %10 = vector.shape_cast %9 : vector<1x128x128xbf16> to vector<128x128xbf16>
    %cst = arith.constant dense<0.000000e+00> : vector<8x128xf32>
    %11 = tpu.matmul %8, %10, %cst {dimension_numbers = #tpu.dot_dimension_numbers<[1], [0], [0], [1], [0, 0, 1, 1], [], []>} : vector<8x128xbf16>, vector<128x128xbf16>, vector<8x128xf32> -> vector<8x128xf32>
    %c0_8 = arith.constant 0 : index
    %c0_9 = arith.constant 0 : index
    %c0_10 = arith.constant 0 : index
    %12 = vector.load %arg6[%c0_8, %c0_9, %c0_10] : memref<1x128x128xbf16, #tpu.memory_space<vmem>>, vector<1x128x128xbf16>
    %13 = vector.shape_cast %12 : vector<1x128x128xbf16> to vector<128x128xbf16>
    %cst_11 = arith.constant dense<0.000000e+00> : vector<8x128xf32>
    %14 = tpu.matmul %8, %13, %cst_11 {dimension_numbers = #tpu.dot_dimension_numbers<[1], [0], [0], [1], [0, 0, 1, 1], [], []>} : vector<8x128xbf16>, vector<128x128xbf16>, vector<8x128xf32> -> vector<8x128xf32>
    %15 = arith.negf %11 : vector<8x128xf32>
    %16 = math.exp %15 : vector<8x128xf32>
    %cst_12 = arith.constant 1.000000e+00 : f32
    %17 = vector.broadcast %cst_12 : f32 to vector<8x128xf32>
    %18 = arith.addf %17, %16 : vector<8x128xf32>
    %19 = arith.divf %17, %18 : vector<8x128xf32>
    %20 = arith.mulf %11, %19 : vector<8x128xf32>
    %21 = arith.mulf %20, %14 : vector<8x128xf32>
    %c0_13 = arith.constant 0 : index
    %c0_14 = arith.constant 0 : index
    %22 = vector.load %arg10[%c0_13, %c0_14] : memref<8x128xf32, #tpu.memory_space<vmem>>, vector<8x128xf32>
    %23 = arith.truncf %21 : vector<8x128xf32> to vector<8x128xbf16>
    %c0_15 = arith.constant 0 : index
    %c0_16 = arith.constant 0 : index
    %c0_17 = arith.constant 0 : index
    %24 = vector.load %arg7[%c0_15, %c0_16, %c0_17] : memref<1x128x128xbf16, #tpu.memory_space<vmem>>, vector<1x128x128xbf16>
    %25 = vector.shape_cast %24 : vector<1x128x128xbf16> to vector<128x128xbf16>
    %cst_18 = arith.constant dense<0.000000e+00> : vector<8x128xf32>
    %26 = tpu.matmul %23, %25, %cst_18 {dimension_numbers = #tpu.dot_dimension_numbers<[1], [0], [0], [1], [0, 0, 1, 1], [], []>} : vector<8x128xbf16>, vector<128x128xbf16>, vector<8x128xf32> -> vector<8x128xf32>
    %27 = arith.addf %22, %26 : vector<8x128xf32>
    %c0_19 = arith.constant 0 : index
    %c0_20 = arith.constant 0 : index
    %28 = vector.load %arg10[%c0_19, %c0_20] : memref<8x128xf32, #tpu.memory_space<vmem>>, vector<8x128xf32>
    tpu.vector_store %arg10[%c0_19, %c0_20], %27 {strides = array<i32>} : memref<8x128xf32, #tpu.memory_space<vmem>>, vector<8x128xf32>,
    %c1_i32 = arith.constant 1 : i32
    %29 = arith.cmpi eq, %arg2, %c1_i32 : i32
    %30 = arith.extui %29 : i1 to i32
    %c0_i32_21 = arith.constant 0 : i32
    %31 = arith.cmpi ne, %30, %c0_i32_21 : i32
    scf.if %31 {
      %c0_24 = arith.constant 0 : index
      %c0_25 = arith.constant 0 : index
      %37 = vector.load %arg9[%c0_24, %c0_25] : memref<8x128xf32, #tpu.memory_space<vmem>>, vector<8x128xf32>
      %c0_26 = arith.constant 0 : index
      %c0_27 = arith.constant 0 : index
      %c0_28 = arith.constant 0 : index
      %38 = vector.load %arg4[%c0_26, %c0_27, %c0_28] : memref<1x8x1xf32, #tpu.memory_space<vmem>>, vector<1x8x1xf32>
      %39 = vector.shape_cast %38 : vector<1x8x1xf32> to vector<8x1xf32>
      %c0_29 = arith.constant 0 : index
      %c0_30 = arith.constant 0 : index
      %40 = vector.load %arg10[%c0_29, %c0_30] : memref<8x128xf32, #tpu.memory_space<vmem>>, vector<8x128xf32>
      %41 = vector.broadcast %39 : vector<8x1xf32> to vector<8x128xf32>
      %42 = arith.mulf %41, %40 : vector<8x128xf32>
      %43 = arith.addf %37, %42 : vector<8x128xf32>
      %c0_31 = arith.constant 0 : index
      %c0_32 = arith.constant 0 : index
      %44 = vector.load %arg9[%c0_31, %c0_32] : memref<8x128xf32, #tpu.memory_space<vmem>>, vector<8x128xf32>
      tpu.vector_store %arg9[%c0_31, %c0_32], %43 {strides = array<i32>} : memref<8x128xf32, #tpu.memory_space<vmem>>, vector<8x128xf32>,
    } else {
    }
    %c7_i32 = arith.constant 7 : i32
    %32 = arith.cmpi eq, %arg1, %c7_i32 : i32
    %c1_i32_22 = arith.constant 1 : i32
    %33 = arith.cmpi eq, %arg2, %c1_i32_22 : i32
    %34 = arith.andi %32, %33 : i1
    %35 = arith.extui %34 : i1 to i32
    %c0_i32_23 = arith.constant 0 : i32
    %36 = arith.cmpi ne, %35, %c0_i32_23 : i32
    scf.if %36 {
      %c0_24 = arith.constant 0 : index
      %c0_25 = arith.constant 0 : index
      %37 = vector.load %arg9[%c0_24, %c0_25] : memref<8x128xf32, #tpu.memory_space<vmem>>, vector<8x128xf32>
      %38 = arith.truncf %37 : vector<8x128xf32> to vector<8x128xbf16>
      %c0_26 = arith.constant 0 : index
      %c0_27 = arith.constant 0 : index
      %39 = vector.load %arg8[%c0_26, %c0_27] : memref<8x128xbf16, #tpu.memory_space<vmem>>, vector<8x128xbf16>
      tpu.vector_store %arg8[%c0_26, %c0_27], %38 {strides = array<i32>} : memref<8x128xbf16, #tpu.memory_space<vmem>>, vector<8x128xbf16>,
    } else {
    }
    return
  }
  func.func @transform_0(%arg0: i32, %arg1: i32, %arg2: i32) -> (i32, i32) {
    %c0_i32 = arith.constant 0 : i32
    %c0_i32_0 = arith.constant 0 : i32
    return %arg0, %c0_i32 : i32, i32
  }
  func.func @transform_1(%arg0: i32, %arg1: i32, %arg2: i32) -> (i32, i32, i32) {
    %c0_i32 = arith.constant 0 : i32
    %c0_i32_0 = arith.constant 0 : i32
    return %arg1, %arg0, %c0_i32 : i32, i32, i32
  }
  func.func @transform_2(%arg0: i32, %arg1: i32, %arg2: i32) -> (i32, i32, i32) {
    %c0_i32 = arith.constant 0 : i32
    %c0_i32_0 = arith.constant 0 : i32
    return %arg1, %c0_i32, %arg2 : i32, i32, i32
  }
  func.func @transform_3(%arg0: i32, %arg1: i32, %arg2: i32) -> (i32, i32, i32) {
    %c0_i32 = arith.constant 0 : i32
    %c0_i32_0 = arith.constant 0 : i32
    return %arg1, %c0_i32, %arg2 : i32, i32, i32
  }
  func.func @transform_4(%arg0: i32, %arg1: i32, %arg2: i32) -> (i32, i32, i32) {
    %c0_i32 = arith.constant 0 : i32
    %c0_i32_0 = arith.constant 0 : i32
    return %arg1, %arg2, %c0_i32 : i32, i32, i32
  }
  func.func @transform_5(%arg0: i32, %arg1: i32, %arg2: i32) -> (i32, i32) {
    %c0_i32 = arith.constant 0 : i32
    %c0_i32_0 = arith.constant 0 : i32
    return %arg0, %c0_i32 : i32, i32
  }
}

</mosaic_0001>

<llo_original>
// kernel: mixtral_sparse_moe.2
$region0: #{mixtral_sparse_moe.2}
  #allocation0 [shape = 'u32[]', space=smem, size = 0x4, offset = 0x4, fixed_abs, tag = 'smem constant byte address 0x4 - core index']
  #allocation1 [shape = 'u32[144,128]{1,0:T(1,128)}', space=vmem, size = 0x12000, scoped, tag = 'internal scratch']
  %s0 = inlined_call_operand.vmem [shape: bf16[16,128], index: 0, kind: input, shape index: {}]
  %s1 = inlined_call_operand.vmem [shape: bf16[1,128], index: 1, kind: input, shape index: {}]
  %s2 = inlined_call_operand.vmem [shape: bf16[128,128], index: 2, kind: input, shape index: {}]
  %s3 = inlined_call_operand.vmem [shape: bf16[16,128], index: 3, kind: output, shape index: {0}]
  %s4 = inlined_call_operand.vmem [shape: f32[16,128], index: 4, kind: output, shape index: {1}]
  %5 = xla_tuple %s3, %s4
  %s6 = sld [smem:[#allocation0]]
  $region53: #{mixtral_sparse_moe.2} parent=0
    _
  %s8 = ssub.s32 1, %s6
  %s9 = scalar_select 0, %s8, %s6
  loop: start=0, step=1, limit=4
  $region2: #{mixtral_sparse_moe.2} parent=0 // loop_pre_header
    _
  $region3: #{mixtral_sparse_moe.2} parent=0 // loop_header
    %s11 = sphi 0, %s15
    %p12 = scmp.ge.s32.totalorder %s11, 4
    %s21 = sphi 0, %s23
    %s24 = sphi 0, %s21
    %s25 = sphi 0, %s24
    %s41 = sphi 0, %s25
    %s45 = sphi 0, %s45
    %s47 = sphi 0, %s45
    %s48 = sphi 0, %s47
    %s62 = sphi 0, %s48
    %s66 = sphi 0, %s66
    %s68 = sphi 0, %s66
    %s69 = sphi 0, %s68
    %s83 = sphi 0, %s69
    %s89 = sphi 0, %s91
    %s92 = sphi 0, %s89
    %s93 = sphi 0, %s92
    %s109 = sphi 0, %s93
    %s115 = sphi 0, %s117
    %s118 = sphi 0, %s115
    %s119 = sphi 0, %s118
    %s135 = sphi 0, %s119
  $region4: #{mixtral_sparse_moe.2} parent=0 // loop_header_branch
    %14 = sbr.rel (%p12) target = $region8
  $region5: #{mixtral_sparse_moe.2} parent=0 // loop_body
    %s16 = ssub.s32 %s11, 1
    %s17 = ssub.s32 %s11, 2
    %s18 = sadd.s32 %s11, 1
    %s19 = ssub.s32 %s11, %s18
    %p20 = scmp.eq.s32.totalorder %s19, 0
    %s22 = sadd.s32 %s21, 1
    %s23 = scalar_select %p20, %s21, %s22
    %p26 = pneg %p20
    %p27 = scmp.eq.s32.totalorder %s11, 1
    %p28 = por %p26, %p27
    %p29 = scmp.ne.s32.totalorder %s21, %s24
    %p30 = scmp.eq.s32.totalorder %s11, 0
    %p31 = por %p29, %p30
    %p32 = scmp.ne.s32.totalorder %s21, %s24
    %p33 = scmp.eq.s32.totalorder %s16, 1
    %p34 = por %p32, %p33
    %p35 = scmp.ne.s32.totalorder %s24, %s25
    %p36 = scmp.eq.s32.totalorder %s16, 0
    %p37 = por %p35, %p36
    %p38 = scmp.ne.s32.totalorder %s24, %s25
    %p39 = scmp.eq.s32.totalorder %s17, 1
    %p40 = por %p38, %p39
    %p42 = scmp.ne.s32.totalorder %s25, %s41
    %p43 = scmp.eq.s32.totalorder %s17, 0
    %p44 = por %p42, %p43
    %s46 = sadd.s32 %s45, 1
    %p49 = scmp.eq.s32.totalorder %s11, 1
    %p50 = scmp.ne.s32.totalorder %s45, %s47
    %p51 = scmp.eq.s32.totalorder %s11, 0
    %p52 = por %p50, %p51
    %p53 = scmp.ne.s32.totalorder %s45, %s47
    %p54 = scmp.eq.s32.totalorder %s16, 1
    %p55 = por %p53, %p54
    %p56 = scmp.ne.s32.totalorder %s47, %s48
    %p57 = scmp.eq.s32.totalorder %s16, 0
    %p58 = por %p56, %p57
    %p59 = scmp.ne.s32.totalorder %s47, %s48
    %p60 = scmp.eq.s32.totalorder %s17, 1
    %p61 = por %p59, %p60
    %p63 = scmp.ne.s32.totalorder %s48, %s62
    %p64 = scmp.eq.s32.totalorder %s17, 0
    %p65 = por %p63, %p64
    %s67 = sadd.s32 %s66, 1
    %p70 = scmp.eq.s32.totalorder %s11, 1
    %p71 = scmp.ne.s32.totalorder %s66, %s68
    %p72 = scmp.eq.s32.totalorder %s11, 0
    %p73 = por %p71, %p72
    %p74 = scmp.ne.s32.totalorder %s66, %s68
    %p75 = scmp.eq.s32.totalorder %s16, 1
    %p76 = por %p74, %p75
    %p77 = scmp.ne.s32.totalorder %s68, %s69
    %p78 = scmp.eq.s32.totalorder %s16, 0
    %p79 = por %p77, %p78
    %p80 = scmp.ne.s32.totalorder %s68, %s69
    %p81 = scmp.eq.s32.totalorder %s17, 1
    %p82 = por %p80, %p81
    %p84 = scmp.ne.s32.totalorder %s69, %s83
    %p85 = scmp.eq.s32.totalorder %s17, 0
    %p86 = por %p84, %p85
    %s87 = ssub.s32 %s11, %s18
    %p88 = scmp.eq.s32.totalorder %s87, 0
    %s90 = sadd.s32 %s89, 1
    %s91 = scalar_select %p88, %s89, %s90
    %p94 = pneg %p88
    %p95 = scmp.eq.s32.totalorder %s11, 1
    %p96 = por %p94, %p95
    %p97 = scmp.ne.s32.totalorder %s89, %s92
    %p98 = scmp.eq.s32.totalorder %s11, 0
    %p99 = por %p97, %p98
    %p100 = scmp.ne.s32.totalorder %s89, %s92
    %p101 = scmp.eq.s32.totalorder %s16, 1
    %p102 = por %p100, %p101
    %p103 = scmp.ne.s32.totalorder %s92, %s93
    %p104 = scmp.eq.s32.totalorder %s16, 0
    %p105 = por %p103, %p104
    %p106 = scmp.ne.s32.totalorder %s92, %s93
    %p107 = scmp.eq.s32.totalorder %s17, 1
    %p108 = por %p106, %p107
    %p110 = scmp.ne.s32.totalorder %s93, %s109
    %p111 = scmp.eq.s32.totalorder %s17, 0
    %p112 = por %p110, %p111
    %s113 = ssub.s32 %s11, %s18
    %p114 = scmp.eq.s32.totalorder %s113, 0
    %s116 = sadd.s32 %s115, 1
    %s117 = scalar_select %p114, %s115, %s116
    %p120 = pneg %p114
    %p121 = scmp.eq.s32.totalorder %s11, 1
    %p122 = por %p120, %p121
    %p123 = scmp.ne.s32.totalorder %s115, %s118
    %p124 = scmp.eq.s32.totalorder %s11, 0
    %p125 = por %p123, %p124
    %p126 = scmp.ne.s32.totalorder %s115, %s118
    %p127 = scmp.eq.s32.totalorder %s16, 1
    %p128 = por %p126, %p127
    %p129 = scmp.ne.s32.totalorder %s118, %s119
    %p130 = scmp.eq.s32.totalorder %s16, 0
    %p131 = por %p129, %p130
    %p132 = scmp.ne.s32.totalorder %s118, %s119
    %p133 = scmp.eq.s32.totalorder %s17, 1
    %p134 = por %p132, %p133
    %p136 = scmp.ne.s32.totalorder %s119, %s135
    %p137 = scmp.eq.s32.totalorder %s17, 0
    %p138 = por %p136, %p137
    %p139 = scmp.le.s32.totalorder 1, %s11
    %p140 = scmp.lt.s32.totalorder %s11, 3
    %p141 = pnand %p139, %p140
    %p142 = pneg %p141
    // Predicated region
    $region9: #{mixtral_sparse_moe.2} parent=5 // pred_check
      _
    $region10: #{mixtral_sparse_moe.2} parent=5 // pred_check_branch
      %144 = sbr.rel (%p141) target = $region12
    $region11: #{mixtral_sparse_moe.2} parent=5 // pred_region
      %s145 = ssub.s32 %s11, 1
      // Predicated region
      $region13: #{mixtral_sparse_moe.2} parent=11 // pred_check
        %p146 = pneg %p58
      $region14: #{mixtral_sparse_moe.2} parent=11 // pred_check_branch
        %148 = sbr.rel (%p146) target = $region16
      $region15: #{mixtral_sparse_moe.2} parent=11 // pred_region
        _
      $region16: #{mixtral_sparse_moe.2} parent=11 // pred_fallthru
        _
      // Predicated region
      $region17: #{mixtral_sparse_moe.2} parent=11 // pred_check
        %p149 = pneg %p79
      $region18: #{mixtral_sparse_moe.2} parent=11 // pred_check_branch
        %151 = sbr.rel (%p149) target = $region20
      $region19: #{mixtral_sparse_moe.2} parent=11 // pred_region
        _
      $region20: #{mixtral_sparse_moe.2} parent=11 // pred_fallthru
        _
    $region12: #{mixtral_sparse_moe.2} parent=5 // pred_fallthru
      _
    %p152 = scmp.lt.s32.totalorder %s11, 2
    // Predicated region
    $region21: #{mixtral_sparse_moe.2} parent=5 // pred_check
      %p153 = pneg %p152
    $region22: #{mixtral_sparse_moe.2} parent=5 // pred_check_branch
      %155 = sbr.rel (%p153) target = $region24
    $region23: #{mixtral_sparse_moe.2} parent=5 // pred_region
      // Predicated region
      $region25: #{mixtral_sparse_moe.2} parent=23 // pred_check
        %p156 = pneg %p31
      $region26: #{mixtral_sparse_moe.2} parent=23 // pred_check_branch
        %158 = sbr.rel (%p156) target = $region28
      $region27: #{mixtral_sparse_moe.2} parent=23 // pred_region
        %p159 = scmp.lt.s32.totalorder %s11, 1
        %s160 = scalar_select %p159, %s11, 1
        %s161 = smul.addr %s160, 4
        %s162 = scalar_lea.vmem %s0, %s161
      $region28: #{mixtral_sparse_moe.2} parent=23 // pred_fallthru
        _
    $region24: #{mixtral_sparse_moe.2} parent=5 // pred_fallthru
      _
    %p163 = scmp.le.s32.totalorder 1, %s11
    %p164 = scmp.lt.s32.totalorder %s11, 3
    %p165 = pnand %p163, %p164
    %p166 = pneg %p165
    // Predicated region
    $region29: #{mixtral_sparse_moe.2} parent=5 // pred_check
      _
    $region30: #{mixtral_sparse_moe.2} parent=5 // pred_check_branch
      %168 = sbr.rel (%p165) target = $region32
    $region31: #{mixtral_sparse_moe.2} parent=5 // pred_region
      %s169 = ssub.s32 %s11, 1
      %p170 = scmp.lt.s32.totalorder %s16, 1
      %s171 = scalar_select %p170, %s16, 1
      %s172 = smul.addr %s171, 4
      %s173 = scalar_lea.vmem %s0, %s172
      %p174 = pneg %p37
      %p175 = pneg %p34
      %p176 = pneg %p58
      %p177 = pneg %p55
      %p178 = pneg %p79
      %p179 = pneg %p76
      %p180 = pneg %p105
      %p181 = pneg %p102
      %p182 = scmp.lt.s32.totalorder %s16, 1
      %s183 = scalar_select %p182, %s16, 1
      %s184 = smul.addr %s183, 4
      %s185 = scalar_lea.vmem %s3, %s184
      %p186 = pneg %p131
      %p187 = pneg %p128
      %p188 = scmp.lt.s32.totalorder %s16, 1
      %s189 = scalar_select %p188, %s16, 1
      %s190 = smul.addr %s189, 8
      %s191 = scalar_lea.vmem %s4, %s190
      %p192 = scmp.lt.s32.totalorder %s16, 1
      %s193 = scalar_select %p192, %s16, 1
      %s194 = smul.addr %s193, 4
      %s195 = scalar_lea.vmem %s0, %s194
      %p196 = scmp.lt.s32.totalorder %s16, 1
      %s197 = scalar_select %p196, %s16, 1
      %s198 = smul.addr %s197, 4
      %s199 = scalar_lea.vmem %s3, %s198
      %p200 = scmp.lt.s32.totalorder %s16, 1
      %s201 = scalar_select %p200, %s16, 1
      %s202 = smul.addr %s201, 8
      %s203 = scalar_lea.vmem %s4, %s202
      %v204 = vld [vmem:[%s195] sm:$0xf]
      %v205 = vunpack.c.l.bf16 %v204
      %v206 = vmul.f32 %v205, %v205
      %207 = vadd.xlane.f32.xlu0 %v206
      %v208 = vpop.xlane.xlu0 %207
      %v209 = vrcp.pop 128.0
      %v210 = vmul.f32 %v208, %v209
      %v211 = vadd.f32 %v210, 1e-05
      %v212 = vrsqrt.pop %v211
      %v213 = vmul.f32 %v205, %v212
      %v214 = vld [vmem:[%s1] sm:$0x1]
      %v215 = vunpack.c.l.bf16 %v214
      %v216 = vlaneseq
      %v217 = vshrl.u32 %v216, 7
      %v218 = vsub.s32 0, %v217
      %v219 = vrot.slane %v215, %v218
      %v220 = vmul.f32 %v213, %v219
      %v221 = vpack.c.bf16 %v220, %v220
      %222 = vst [vmem:[%s199] sm:$0xf] %v221
      %v223 = vld [vmem:[%s2] sm:$0xf]
      %v224 = vld [vmem:[%s2 + $0x4] sm:$0xf]
      %v225 = vld [vmem:[%s2 + $0x8] sm:$0xf]
      %v226 = vld [vmem:[%s2 + $0xc] sm:$0xf]
      %v227 = vld [vmem:[%s2 + $0x10] sm:$0xf]
      %v228 = vld [vmem:[%s2 + $0x14] sm:$0xf]
      %v229 = vld [vmem:[%s2 + $0x18] sm:$0xf]
      %v230 = vld [vmem:[%s2 + $0x1c] sm:$0xf]
      %v231 = vld [vmem:[%s2 + $0x20] sm:$0xf]
      %v232 = vld [vmem:[%s2 + $0x24] sm:$0xf]
      %v233 = vld [vmem:[%s2 + $0x28] sm:$0xf]
      %v234 = vld [vmem:[%s2 + $0x2c] sm:$0xf]
      %v235 = vld [vmem:[%s2 + $0x30] sm:$0xf]
      %v236 = vld [vmem:[%s2 + $0x34] sm:$0xf]
      %v237 = vld [vmem:[%s2 + $0x38] sm:$0xf]
      %v238 = vld [vmem:[%s2 + $0x3c] sm:$0xf]
      %v239 = vunpack.c.l.bf16 %v223
      %v240 = vunpack.c.l.bf16 %v224
      %v241 = vunpack.c.l.bf16 %v225
      %v242 = vunpack.c.l.bf16 %v226
      %v243 = vunpack.c.l.bf16 %v227
      %v244 = vunpack.c.l.bf16 %v228
      %v245 = vunpack.c.l.bf16 %v229
      %v246 = vunpack.c.l.bf16 %v230
      %v247 = vunpack.c.l.bf16 %v231
      %v248 = vunpack.c.l.bf16 %v232
      %v249 = vunpack.c.l.bf16 %v233
      %v250 = vunpack.c.l.bf16 %v234
      %v251 = vunpack.c.l.bf16 %v235
      %v252 = vunpack.c.l.bf16 %v236
      %v253 = vunpack.c.l.bf16 %v237
      %v254 = vunpack.c.l.bf16 %v238
      %255 = vmatprep.subr.mxu0 0.0
      %256 = vmatpush1.msra.mxu0 %v254
      %257 = vmatprep.subr.mxu0 0.0
      %258 = vmatpush1.msra.mxu0 %v253
      %259 = vmatprep.subr.mxu0 0.0
      %260 = vmatpush1.msra.mxu0 %v252
      %261 = vmatprep.subr.mxu0 0.0
      %262 = vmatpush1.msra.mxu0 %v251
      %263 = vmatprep.subr.mxu0 0.0
      %264 = vmatpush1.msra.mxu0 %v250
      %265 = vmatprep.subr.mxu0 0.0
      %266 = vmatpush1.msra.mxu0 %v249
      %267 = vmatprep.subr.mxu0 0.0
      %268 = vmatpush1.msra.mxu0 %v248
      %269 = vmatprep.subr.mxu0 0.0
      %270 = vmatpush1.msra.mxu0 %v247
      %271 = vmatprep.subr.mxu0 0.0
      %272 = vmatpush1.msra.mxu0 %v246
      %273 = vmatprep.subr.mxu0 0.0
      %274 = vmatpush1.msra.mxu0 %v245
      %275 = vmatprep.subr.mxu0 0.0
      %276 = vmatpush1.msra.mxu0 %v244
      %277 = vmatprep.subr.mxu0 0.0
      %278 = vmatpush1.msra.mxu0 %v243
      %279 = vmatprep.subr.mxu0 0.0
      %280 = vmatpush1.msra.mxu0 %v242
      %281 = vmatprep.subr.mxu0 0.0
      %282 = vmatpush1.msra.mxu0 %v241
      %283 = vmatprep.subr.mxu0 0.0
      %284 = vmatpush1.msra.mxu0 %v240
      %285 = vmatprep.subr.mxu0 0.0
      %286 = vmatpush1.msra.mxu0 %v239
      %287 = vmatprep.subr.mxu0 0.0
      %288 = vmatpush2.msra.mxu0 0.0
      %289 = vmatprep.subr.mxu0 0.0
      %290 = vmatpush2.msra.mxu0 0.0
      %291 = vmatprep.subr.mxu0 0.0
      %292 = vmatpush2.msra.mxu0 0.0
      %293 = vmatprep.subr.mxu0 0.0
      %294 = vmatpush2.msra.mxu0 0.0
      %295 = vmatprep.subr.mxu0 0.0
      %296 = vmatpush2.msra.mxu0 0.0
      %297 = vmatprep.subr.mxu0 0.0
      %298 = vmatpush2.msra.mxu0 0.0
      %299 = vmatprep.subr.mxu0 0.0
      %300 = vmatpush2.msra.mxu0 0.0
      %301 = vmatprep.subr.mxu0 0.0
      %302 = vmatpush2.msra.mxu0 0.0
      %303 = vmatprep.subr.mxu0 0.0
      %304 = vmatpush2.msra.mxu0 0.0
      %305 = vmatprep.subr.mxu0 0.0
      %306 = vmatpush2.msra.mxu0 0.0
      %307 = vmatprep.subr.mxu0 0.0
      %308 = vmatpush2.msra.mxu0 0.0
      %309 = vmatprep.subr.mxu0 0.0
      %310 = vmatpush2.msra.mxu0 0.0
      %311 = vmatprep.subr.mxu0 0.0
      %312 = vmatpush2.msra.mxu0 0.0
      %313 = vmatprep.subr.mxu0 0.0
      %314 = vmatpush2.msra.mxu0 0.0
      %315 = vmatprep.subr.mxu0 0.0
      %316 = vmatpush2.msra.mxu0 0.0
      %317 = vmatprep.subr.mxu0 0.0
      %318 = vmatpush2.msra.mxu0 0.0
      %319 = vmatprep.mubr.f32.mxu0 0.0
      %320 = vmatmul.mubr.f32.gmra.mxu0 %v220
      %v321 = vpop.f32.mrf.mxu0
      %v322 = vadd.f32 0.0, %v321
      %v323 = vpop.f32.mrf.mxu0
      %324 = vdwg.mxu0
      %325 = vst [vmem:[%s203] sm:$0xff] %v322
      %p326 = scmp.lt.s32.totalorder %s16, 1
      %s327 = scalar_select %p326, %s16, 1
      %s328 = smul.addr %s327, 4
      %s329 = scalar_lea.vmem %s3, %s328
      %p330 = scmp.lt.s32.totalorder %s16, 1
      %s331 = scalar_select %p330, %s16, 1
      %s332 = smul.addr %s331, 8
      %s333 = scalar_lea.vmem %s4, %s332
      // Predicated region
      $region33: #{mixtral_sparse_moe.2} parent=31 // pred_check
        %p334 = pneg %p102
      $region34: #{mixtral_sparse_moe.2} parent=31 // pred_check_branch
        %336 = sbr.rel (%p334) target = $region36
      $region35: #{mixtral_sparse_moe.2} parent=31 // pred_region
        _
      $region36: #{mixtral_sparse_moe.2} parent=31 // pred_fallthru
        _
      // Predicated region
      $region37: #{mixtral_sparse_moe.2} parent=31 // pred_check
        %p337 = pneg %p128
      $region38: #{mixtral_sparse_moe.2} parent=31 // pred_check_branch
        %339 = sbr.rel (%p337) target = $region40
      $region39: #{mixtral_sparse_moe.2} parent=31 // pred_region
        _
      $region40: #{mixtral_sparse_moe.2} parent=31 // pred_fallthru
        _
    $region32: #{mixtral_sparse_moe.2} parent=5 // pred_fallthru
      _
    %p340 = scmp.le.s32.totalorder 2, %s11
    // Predicated region
    $region41: #{mixtral_sparse_moe.2} parent=5 // pred_check
      %p341 = pneg %p340
    $region42: #{mixtral_sparse_moe.2} parent=5 // pred_check_branch
      %343 = sbr.rel (%p341) target = $region44
    $region43: #{mixtral_sparse_moe.2} parent=5 // pred_region
      %s344 = ssub.s32 %s11, 2
      // Predicated region
      $region45: #{mixtral_sparse_moe.2} parent=43 // pred_check
        %p345 = pneg %p108
      $region46: #{mixtral_sparse_moe.2} parent=43 // pred_check_branch
        %347 = sbr.rel (%p345) target = $region48
      $region47: #{mixtral_sparse_moe.2} parent=43 // pred_region
        %p348 = scmp.lt.s32.totalorder %s17, 1
        %s349 = scalar_select %p348, %s17, 1
        %s350 = smul.addr %s349, 4
        %s351 = scalar_lea.vmem %s3, %s350
      $region48: #{mixtral_sparse_moe.2} parent=43 // pred_fallthru
        _
      // Predicated region
      $region49: #{mixtral_sparse_moe.2} parent=43 // pred_check
        %p352 = pneg %p134
      $region50: #{mixtral_sparse_moe.2} parent=43 // pred_check_branch
        %354 = sbr.rel (%p352) target = $region52
      $region51: #{mixtral_sparse_moe.2} parent=43 // pred_region
        %p355 = scmp.lt.s32.totalorder %s17, 1
        %s356 = scalar_select %p355, %s17, 1
        %s357 = smul.addr %s356, 8
        %s358 = scalar_lea.vmem %s4, %s357
      $region52: #{mixtral_sparse_moe.2} parent=43 // pred_fallthru
        _
    $region44: #{mixtral_sparse_moe.2} parent=5 // pred_fallthru
      _
  $region6: #{mixtral_sparse_moe.2} parent=0 // loop_footer
    %s15 = sadd.s32 1, %s11
  $region7: #{mixtral_sparse_moe.2} parent=0 // loop_footer_branch
    %10 = sbr.rel target = $region3
  $region8: #{mixtral_sparse_moe.2} parent=0 // loop_exit
    _

// kernel: mixtral_sparse_moe.3
$region0: #{mixtral_sparse_moe.3}
  #allocation0 [shape = 'u32[]', space=smem, size = 0x4, offset = 0x4, fixed_abs, tag = 'smem constant byte address 0x4 - core index']
  #allocation1 [shape = 'u32[144,128]{1,0:T(1,128)}', space=vmem, size = 0x12000, scoped, tag = 'internal scratch']
  #allocation2 [shape = 'f32[8,128]{1,0:T(8,128)}', space=vmem, size = 0x1000, scoped, tag = 'scratch operand']
  #allocation3 [shape = 'f32[8,128]{1,0:T(8,128)}', space=vmem, size = 0x1000, scoped, tag = 'scratch operand']
  %s0 = inlined_call_operand.vmem [shape: bf16[16,128], index: 0, kind: input, shape index: {}]
  %s1 = inlined_call_operand.vmem [shape: f32[8,16,1], index: 1, kind: input, shape index: {}]
  %s2 = inlined_call_operand.hbm [shape: bf16[8,128,256], index: 2, kind: input, shape index: {}]
  %s3 = inlined_call_operand.hbm [shape: bf16[8,128,256], index: 3, kind: input, shape index: {}]
  %s4 = inlined_call_operand.hbm [shape: bf16[8,256,128], index: 4, kind: input, shape index: {}]
  %s5 = inlined_call_operand.hbm [shape: bf16[16,128], index: 5, kind: output, shape index: {}]
  %s6 = sld [smem:[#allocation0]]
  $region81: #{mixtral_sparse_moe.3} parent=0
    _
  %s8 = ssub.s32 1, %s6
  %s9 = scalar_select 0, %s8, %s6
  $region1: #{mixtral_sparse_moe.3} parent=0
    #allocation4 [shape = 'u8[65536]{0}', space=vmem, size = 0x10000, scoped, tag = 'input window, operand 2']
    #allocation5 [shape = 's32[2]{0}', space=sflag, size = 0x8, scoped, tag = 'scoped memory for mixtral_sparse_moe.3']
    #allocation6 [shape = 's32[2]{0}', space=sflag, size = 0x8, scoped, tag = 'scoped memory for mixtral_sparse_moe.3']
    #allocation7 [shape = 'u8[65536]{0}', space=vmem, size = 0x10000, scoped, tag = 'input window, operand 3']
    #allocation8 [shape = 's32[2]{0}', space=sflag, size = 0x8, scoped, tag = 'scoped memory for mixtral_sparse_moe.3']
    #allocation9 [shape = 'u8[65536]{0}', space=vmem, size = 0x10000, scoped, tag = 'input window, operand 4']
    #allocation10 [shape = 'u8[4096]{0}', space=vmem, size = 0x1000, scoped, tag = 'output window, operand 0']
    %10 = vsyncpa [#allocation5], 0
    %s11 = scalar_lea.sflag [#allocation5], 1
    %12 = vsyncpa %s11, 0
    %13 = vsyncpa [#allocation8], 0
    %s14 = scalar_lea.sflag [#allocation8], 1
    %15 = vsyncpa %s14, 0
    %16 = vsyncpa [#allocation6], 0
    %s17 = scalar_lea.sflag [#allocation6], 1
    %18 = vsyncpa %s17, 0
    loop: start=0, step=1, limit=34
    $region2: #{mixtral_sparse_moe.3} parent=1 // loop_pre_header
      _
    $region3: #{mixtral_sparse_moe.3} parent=1 // loop_header
      %s20 = sphi 0, %s24
      %p21 = scmp.ge.s32.totalorder %s20, 34
      %s27 = sphi 0, %s46
      %s28 = sphi 0, %s42
      %s29 = sphi 0, %s38
      %s30 = sphi 0, %s27
      %s31 = sphi 0, %s28
      %s32 = sphi 0, %s29
      %s33 = sphi 0, %s30
      %s34 = sphi 0, %s31
      %s35 = sphi 0, %s32
      %s49 = sphi 0, %s51
      %s52 = sphi 0, %s49
      %s53 = sphi 0, %s52
      %s69 = sphi 0, %s53
      %s77 = sphi 0, %s79
      %s80 = sphi 0, %s77
      %s81 = sphi 0, %s80
      %s97 = sphi 0, %s81
      %s105 = sphi 0, %s107
      %s108 = sphi 0, %s105
      %s109 = sphi 0, %s108
      %s125 = sphi 0, %s109
      %s133 = sphi 0, %s135
      %s136 = sphi 0, %s133
      %s137 = sphi 0, %s136
      %s153 = sphi 0, %s137
      %s161 = sphi 0, %s163
      %s164 = sphi 0, %s161
      %s165 = sphi 0, %s164
      %s181 = sphi 0, %s165
      %s187 = sphi 0, %s189
      %s190 = sphi 0, %s187
      %s191 = sphi 0, %s190
      %s207 = sphi 0, %s191
    $region4: #{mixtral_sparse_moe.3} parent=1 // loop_header_branch
      %23 = sbr.rel (%p21) target = $region8
    $region5: #{mixtral_sparse_moe.3} parent=1 // loop_body
      %s25 = ssub.s32 %s20, 1
      %s26 = ssub.s32 %s20, 2
      %s36 = sadd.s32 1, %s29
      %p37 = scmp.ge.s32.totalorder %s36, 2
      %s38 = scalar_select %p37, 0, %s36
      %s39 = sadd.s32 1, %s28
      %s40 = scalar_select %p37, %s39, %s28
      %p41 = scmp.ge.s32.totalorder %s40, 8
      %s42 = scalar_select %p41, 0, %s40
      %s43 = sadd.s32 1, %s27
      %s44 = scalar_select %p41, %s43, %s27
      %p45 = scmp.ge.s32.totalorder %s44, 2
      %s46 = scalar_select %p45, 0, %s44
      %s47 = ssub.s32 %s27, %s46
      %p48 = scmp.eq.s32.totalorder %s47, 0
      %s50 = sadd.s32 %s49, 1
      %s51 = scalar_select %p48, %s49, %s50
      %p54 = pneg %p48
      %p55 = scmp.eq.s32.totalorder %s20, 31
      %p56 = por %p54, %p55
      %p57 = scmp.ne.s32.totalorder %s49, %s52
      %p58 = scmp.eq.s32.totalorder %s20, 0
      %p59 = por %p57, %p58
      %p60 = scmp.ne.s32.totalorder %s49, %s52
      %p61 = scmp.eq.s32.totalorder %s25, 31
      %p62 = por %p60, %p61
      %p63 = scmp.ne.s32.totalorder %s52, %s53
      %p64 = scmp.eq.s32.totalorder %s25, 0
      %p65 = por %p63, %p64
      %p66 = scmp.ne.s32.totalorder %s52, %s53
      %p67 = scmp.eq.s32.totalorder %s26, 31
      %p68 = por %p66, %p67
      %p70 = scmp.ne.s32.totalorder %s53, %s69
      %p71 = scmp.eq.s32.totalorder %s26, 0
      %p72 = por %p70, %p71
      %s73 = ssub.s32 %s28, %s42
      %s74 = ssub.s32 %s27, %s46
      %s75 = sor.u32 %s73, %s74
      %p76 = scmp.eq.s32.totalorder %s75, 0
      %s78 = sadd.s32 %s77, 1
      %s79 = scalar_select %p76, %s77, %s78
      %p82 = pneg %p76
      %p83 = scmp.eq.s32.totalorder %s20, 31
      %p84 = por %p82, %p83
      %p85 = scmp.ne.s32.totalorder %s77, %s80
      %p86 = scmp.eq.s32.totalorder %s20, 0
      %p87 = por %p85, %p86
      %p88 = scmp.ne.s32.totalorder %s77, %s80
      %p89 = scmp.eq.s32.totalorder %s25, 31
      %p90 = por %p88, %p89
      %p91 = scmp.ne.s32.totalorder %s80, %s81
      %p92 = scmp.eq.s32.totalorder %s25, 0
      %p93 = por %p91, %p92
      %p94 = scmp.ne.s32.totalorder %s80, %s81
      %p95 = scmp.eq.s32.totalorder %s26, 31
      %p96 = por %p94, %p95
      %p98 = scmp.ne.s32.totalorder %s81, %s97
      %p99 = scmp.eq.s32.totalorder %s26, 0
      %p100 = por %p98, %p99
      %s101 = ssub.s32 %s28, %s42
      %s102 = ssub.s32 %s29, %s38
      %s103 = sor.u32 %s101, %s102
      %p104 = scmp.eq.s32.totalorder %s103, 0
      %s106 = sadd.s32 %s105, 1
      %s107 = scalar_select %p104, %s105, %s106
      %p110 = pneg %p104
      %p111 = scmp.eq.s32.totalorder %s20, 31
      %p112 = por %p110, %p111
      %p113 = scmp.ne.s32.totalorder %s105, %s108
      %p114 = scmp.eq.s32.totalorder %s20, 0
      %p115 = por %p113, %p114
      %p116 = scmp.ne.s32.totalorder %s105, %s108
      %p117 = scmp.eq.s32.totalorder %s25, 31
      %p118 = por %p116, %p117
      %p119 = scmp.ne.s32.totalorder %s108, %s109
      %p120 = scmp.eq.s32.totalorder %s25, 0
      %p121 = por %p119, %p120
      %p122 = scmp.ne.s32.totalorder %s108, %s109
      %p123 = scmp.eq.s32.totalorder %s26, 31
      %p124 = por %p122, %p123
      %p126 = scmp.ne.s32.totalorder %s109, %s125
      %p127 = scmp.eq.s32.totalorder %s26, 0
      %p128 = por %p126, %p127
      %s129 = ssub.s32 %s28, %s42
      %s130 = ssub.s32 %s29, %s38
      %s131 = sor.u32 %s129, %s130
      %p132 = scmp.eq.s32.totalorder %s131, 0
      %s134 = sadd.s32 %s133, 1
      %s135 = scalar_select %p132, %s133, %s134
      %p138 = pneg %p132
      %p139 = scmp.eq.s32.totalorder %s20, 31
      %p140 = por %p138, %p139
      %p141 = scmp.ne.s32.totalorder %s133, %s136
      %p142 = scmp.eq.s32.totalorder %s20, 0
      %p143 = por %p141, %p142
      %p144 = scmp.ne.s32.totalorder %s133, %s136
      %p145 = scmp.eq.s32.totalorder %s25, 31
      %p146 = por %p144, %p145
      %p147 = scmp.ne.s32.totalorder %s136, %s137
      %p148 = scmp.eq.s32.totalorder %s25, 0
      %p149 = por %p147, %p148
      %p150 = scmp.ne.s32.totalorder %s136, %s137
      %p151 = scmp.eq.s32.totalorder %s26, 31
      %p152 = por %p150, %p151
      %p154 = scmp.ne.s32.totalorder %s137, %s153
      %p155 = scmp.eq.s32.totalorder %s26, 0
      %p156 = por %p154, %p155
      %s157 = ssub.s32 %s28, %s42
      %s158 = ssub.s32 %s29, %s38
      %s159 = sor.u32 %s157, %s158
      %p160 = scmp.eq.s32.totalorder %s159, 0
      %s162 = sadd.s32 %s161, 1
      %s163 = scalar_select %p160, %s161, %s162
      %p166 = pneg %p160
      %p167 = scmp.eq.s32.totalorder %s20, 31
      %p168 = por %p166, %p167
      %p169 = scmp.ne.s32.totalorder %s161, %s164
      %p170 = scmp.eq.s32.totalorder %s20, 0
      %p171 = por %p169, %p170
      %p172 = scmp.ne.s32.totalorder %s161, %s164
      %p173 = scmp.eq.s32.totalorder %s25, 31
      %p174 = por %p172, %p173
      %p175 = scmp.ne.s32.totalorder %s164, %s165
      %p176 = scmp.eq.s32.totalorder %s25, 0
      %p177 = por %p175, %p176
      %p178 = scmp.ne.s32.totalorder %s164, %s165
      %p179 = scmp.eq.s32.totalorder %s26, 31
      %p180 = por %p178, %p179
      %p182 = scmp.ne.s32.totalorder %s165, %s181
      %p183 = scmp.eq.s32.totalorder %s26, 0
      %p184 = por %p182, %p183
      %s185 = ssub.s32 %s27, %s46
      %p186 = scmp.eq.s32.totalorder %s185, 0
      %s188 = sadd.s32 %s187, 1
      %s189 = scalar_select %p186, %s187, %s188
      %p192 = pneg %p186
      %p193 = scmp.eq.s32.totalorder %s20, 31
      %p194 = por %p192, %p193
      %p195 = scmp.ne.s32.totalorder %s187, %s190
      %p196 = scmp.eq.s32.totalorder %s20, 0
      %p197 = por %p195, %p196
      %p198 = scmp.ne.s32.totalorder %s187, %s190
      %p199 = scmp.eq.s32.totalorder %s25, 31
      %p200 = por %p198, %p199
      %p201 = scmp.ne.s32.totalorder %s190, %s191
      %p202 = scmp.eq.s32.totalorder %s25, 0
      %p203 = por %p201, %p202
      %p204 = scmp.ne.s32.totalorder %s190, %s191
      %p205 = scmp.eq.s32.totalorder %s26, 31
      %p206 = por %p204, %p205
      %p208 = scmp.ne.s32.totalorder %s191, %s207
      %p209 = scmp.eq.s32.totalorder %s26, 0
      %p210 = por %p208, %p209
      %p211 = scmp.le.s32.totalorder 1, %s20
      %p212 = scmp.lt.s32.totalorder %s20, 33
      %p213 = pnand %p211, %p212
      %p214 = pneg %p213
      // Predicated region
      $region9: #{mixtral_sparse_moe.3} parent=5 // pred_check
        _
      $region10: #{mixtral_sparse_moe.3} parent=5 // pred_check_branch
        %216 = sbr.rel (%p213) target = $region12
      $region11: #{mixtral_sparse_moe.3} parent=5 // pred_region
        %s217 = ssub.s32 %s20, 1
      $region12: #{mixtral_sparse_moe.3} parent=5 // pred_fallthru
        _
      %p218 = scmp.lt.s32.totalorder %s20, 32
      // Predicated region
      $region13: #{mixtral_sparse_moe.3} parent=5 // pred_check
        %p219 = pneg %p218
      $region14: #{mixtral_sparse_moe.3} parent=5 // pred_check_branch
        %221 = sbr.rel (%p219) target = $region16
      $region15: #{mixtral_sparse_moe.3} parent=5 // pred_region
        // Predicated region
        $region17: #{mixtral_sparse_moe.3} parent=15 // pred_check
          %p222 = pneg %p59
        $region18: #{mixtral_sparse_moe.3} parent=15 // pred_check_branch
          %224 = sbr.rel (%p222) target = $region20
        $region19: #{mixtral_sparse_moe.3} parent=15 // pred_region
          %p225 = scmp.lt.s32.totalorder %s27, 1
          %s226 = scalar_select %p225, %s27, 1
          %s227 = smul.addr %s226, 4
          %s228 = scalar_lea.vmem %s0, %s227
        $region20: #{mixtral_sparse_moe.3} parent=15 // pred_fallthru
          _
        // Predicated region
        $region21: #{mixtral_sparse_moe.3} parent=15 // pred_check
          %p229 = pneg %p87
        $region22: #{mixtral_sparse_moe.3} parent=15 // pred_check_branch
          %231 = sbr.rel (%p229) target = $region24
        $region23: #{mixtral_sparse_moe.3} parent=15 // pred_region
          %p232 = scmp.lt.s32.totalorder %s28, 7
          %s233 = scalar_select %p232, %s28, 7
          %p234 = scmp.lt.s32.totalorder %s27, 1
          %s235 = scalar_select %p234, %s27, 1
          %s236 = smul.addr %s233, 2
          %s237 = sadd.s32 %s235, %s236
          %s238 = smul.addr %s237, 8
          %s239 = scalar_lea.vmem %s1, %s238
        $region24: #{mixtral_sparse_moe.3} parent=15 // pred_fallthru
          _
        // Predicated region
        $region25: #{mixtral_sparse_moe.3} parent=15 // pred_check
          %p240 = pneg %p115
        $region26: #{mixtral_sparse_moe.3} parent=15 // pred_check_branch
          %242 = sbr.rel (%p240) target = $region28
        $region27: #{mixtral_sparse_moe.3} parent=15 // pred_region
          %s243 = sand.u32 %s105, 1
          %s244 = scalar_lea.sflag [#allocation5], %s243
          %s245 = sand.u32 %s105, 1
          %s246 = smul.addr %s245, 64
          %s247 = scalar_lea.vmem [#allocation4], %s246
          %s249 = ssub.s32 1024, 1024
          %250 = vsyncadd %s244, %s249
          %s251 = smul.addr %s28, 32
          %s252 = sadd.s32 %s29, %s251
          %s253 = smul.addr %s252, 64
          %s254 = scalar_lea.hbm %s2, %s253
          %s255 = sshll.u32 %s247, 4
          %s256 = int_to_ptr.vmem [resolvable:$true] %s255
          %261 = dma.hbm_to_vmem [thread:$0]  %s254, 1024, %s256, %s244, 128, 64, 4
        $region28: #{mixtral_sparse_moe.3} parent=15 // pred_fallthru
          _
        // Predicated region
        $region29: #{mixtral_sparse_moe.3} parent=15 // pred_check
          %p262 = pneg %p143
        $region30: #{mixtral_sparse_moe.3} parent=15 // pred_check_branch
          %264 = sbr.rel (%p262) target = $region32
        $region31: #{mixtral_sparse_moe.3} parent=15 // pred_region
          %s265 = sand.u32 %s20, 1
          %s266 = scalar_lea.sflag [#allocation8], %s265
          %s267 = sand.u32 %s133, 1
          %s268 = smul.addr %s267, 64
          %s269 = scalar_lea.vmem [#allocation7], %s268
          %s271 = ssub.s32 1024, 1024
          %272 = vsyncadd %s266, %s271
          %s273 = smul.addr %s28, 32
          %s274 = sadd.s32 %s29, %s273
          %s275 = smul.addr %s274, 64
          %s276 = scalar_lea.hbm %s3, %s275
          %s277 = sshll.u32 %s269, 4
          %s278 = int_to_ptr.vmem [resolvable:$true] %s277
          %283 = dma.hbm_to_vmem [thread:$0]  %s276, 1024, %s278, %s266, 128, 64, 4
        $region32: #{mixtral_sparse_moe.3} parent=15 // pred_fallthru
          _
        // Predicated region
        $region33: #{mixtral_sparse_moe.3} parent=15 // pred_check
          %p284 = pneg %p171
        $region34: #{mixtral_sparse_moe.3} parent=15 // pred_check_branch
          %286 = sbr.rel (%p284) target = $region36
        $region35: #{mixtral_sparse_moe.3} parent=15 // pred_region
          %s287 = sand.u32 %s20, 1
          %s288 = scalar_lea.sflag [#allocation8], %s287
          %s289 = sand.u32 %s161, 1
          %s290 = smul.addr %s289, 64
          %s291 = scalar_lea.vmem [#allocation9], %s290
          %s292 = smul.u32 16, %s29
          %s294 = ssub.s32 1024, 1024
          %295 = vsyncadd %s288, %s294
          %s296 = smul.addr %s28, 32
          %s297 = sadd.s32 %s292, %s296
          %s298 = smul.addr %s297, 64
          %s299 = scalar_lea.hbm %s4, %s298
          %s300 = sshll.u32 %s291, 4
          %s301 = int_to_ptr.vmem [resolvable:$true] %s300
          %306 = dma.hbm_to_vmem [thread:$0]  %s299, 1024, %s301, %s288, 64, 64, 4
        $region36: #{mixtral_sparse_moe.3} parent=15 // pred_fallthru
          _
      $region16: #{mixtral_sparse_moe.3} parent=5 // pred_fallthru
        _
      %p307 = scmp.le.s32.totalorder 1, %s20
      %p308 = scmp.lt.s32.totalorder %s20, 33
      %p309 = pnand %p307, %p308
      %p310 = pneg %p309
      // Predicated region
      $region37: #{mixtral_sparse_moe.3} parent=5 // pred_check
        _
      $region38: #{mixtral_sparse_moe.3} parent=5 // pred_check_branch
        %312 = sbr.rel (%p309) target = $region40
      $region39: #{mixtral_sparse_moe.3} parent=5 // pred_region
        %s313 = ssub.s32 %s20, 1
        %s314 = sand.u32 %s108, 1
        %s315 = scalar_lea.sflag [#allocation5], %s314
        %s316 = sand.u32 %s108, 1
        %s317 = smul.addr %s316, 64
        %s318 = scalar_lea.vmem [#allocation4], %s317
        // Predicated region
        $region41: #{mixtral_sparse_moe.3} parent=39 // pred_check
          %p319 = pneg %p121
        $region42: #{mixtral_sparse_moe.3} parent=39 // pred_check_branch
          %321 = sbr.rel (%p319) target = $region44
        $region43: #{mixtral_sparse_moe.3} parent=39 // pred_region
          %322 = dma.done %s315, 1024
        $region44: #{mixtral_sparse_moe.3} parent=39 // pred_fallthru
          _
        %s323 = sand.u32 %s25, 1
        %s324 = scalar_lea.sflag [#allocation8], %s323
        %s325 = sand.u32 %s136, 1
        %s326 = smul.addr %s325, 64
        %s327 = scalar_lea.vmem [#allocation7], %s326
        // Predicated region
        $region45: #{mixtral_sparse_moe.3} parent=39 // pred_check
          %p328 = pneg %p149
        $region46: #{mixtral_sparse_moe.3} parent=39 // pred_check_branch
          %330 = sbr.rel (%p328) target = $region48
        $region47: #{mixtral_sparse_moe.3} parent=39 // pred_region
          %331 = dma.done %s324, 1024
        $region48: #{mixtral_sparse_moe.3} parent=39 // pred_fallthru
          _
        %s332 = sand.u32 %s25, 1
        %s333 = scalar_lea.sflag [#allocation8], %s332
        %s334 = sand.u32 %s164, 1
        %s335 = smul.addr %s334, 64
        %s336 = scalar_lea.vmem [#allocation9], %s335
        // Predicated region
        $region49: #{mixtral_sparse_moe.3} parent=39 // pred_check
          %p337 = pneg %p177
        $region50: #{mixtral_sparse_moe.3} parent=39 // pred_check_branch
          %339 = sbr.rel (%p337) target = $region52
        $region51: #{mixtral_sparse_moe.3} parent=39 // pred_region
          %340 = dma.done %s333, 1024
        $region52: #{mixtral_sparse_moe.3} parent=39 // pred_fallthru
          _
        %p341 = scmp.lt.s32.totalorder %s30, 1
        %s342 = scalar_select %p341, %s30, 1
        %s343 = smul.addr %s342, 4
        %s344 = scalar_lea.vmem %s0, %s343
        %p345 = pneg %p65
        %p346 = pneg %p62
        %p347 = scmp.lt.s32.totalorder %s31, 7
        %s348 = scalar_select %p347, %s31, 7
        %p349 = scmp.lt.s32.totalorder %s30, 1
        %s350 = scalar_select %p349, %s30, 1
        %s351 = smul.addr %s348, 2
        %s352 = sadd.s32 %s350, %s351
        %s353 = smul.addr %s352, 8
        %s354 = scalar_lea.vmem %s1, %s353
        %p355 = pneg %p93
        %p356 = pneg %p90
        %s357 = sand.u32 %s108, 1
        %s358 = scalar_lea.sflag [#allocation5], %s357
        %s359 = sand.u32 %s108, 1
        %s360 = smul.addr %s359, 64
        %s361 = scalar_lea.vmem [#allocation4], %s360
        %p362 = pneg %p121
        %p363 = pneg %p118
        %s364 = sand.u32 %s25, 1
        %s365 = scalar_lea.sflag [#allocation8], %s364
        %s366 = sand.u32 %s136, 1
        %s367 = smul.addr %s366, 64
        %s368 = scalar_lea.vmem [#allocation7], %s367
        %p369 = pneg %p149
        %p370 = pneg %p146
        %s371 = sand.u32 %s25, 1
        %s372 = scalar_lea.sflag [#allocation8], %s371
        %s373 = sand.u32 %s164, 1
        %s374 = smul.addr %s373, 64
        %s375 = scalar_lea.vmem [#allocation9], %s374
        %p376 = pneg %p177
        %p377 = pneg %p174
        %p378 = pneg %p203
        %p379 = pneg %p200
        %s380 = sand.u32 %s190, 1
        %s381 = scalar_lea.sflag [#allocation6], %s380
        %s382 = sand.u32 %s190, 1
        %s383 = smul.addr %s382, 4
        %s384 = scalar_lea.vmem [#allocation10], %s383
        %p385 = scmp.lt.s32.totalorder %s30, 1
        %s386 = scalar_select %p385, %s30, 1
        %s387 = smul.addr %s386, 4
        %s388 = scalar_lea.vmem %s0, %s387
        %p389 = scmp.lt.s32.totalorder %s31, 7
        %s390 = scalar_select %p389, %s31, 7
        %p391 = scmp.lt.s32.totalorder %s30, 1
        %s392 = scalar_select %p391, %s30, 1
        %s393 = smul.addr %s390, 2
        %s394 = sadd.s32 %s392, %s393
        %s395 = smul.addr %s394, 8
        %s396 = scalar_lea.vmem %s1, %s395
        %s397 = smul.u32 16, %s32
        %p399 = scmp.eq.s32.totalorder %s31, 0
        %p400 = scmp.eq.s32.totalorder %s32, 0
        %p401 = pnand %p399, %p400
        %p402 = pneg %p401
        // Predicated region
        $region53: #{mixtral_sparse_moe.3} parent=39 // pred_check
          _
        $region54: #{mixtral_sparse_moe.3} parent=39 // pred_check_branch
          %404 = sbr.rel (%p401) target = $region56
        $region55: #{mixtral_sparse_moe.3} parent=39 // pred_region
          %405 = vst [vmem:[#allocation2] sm:$0xff] 0.0
        $region56: #{mixtral_sparse_moe.3} parent=39 // pred_fallthru
          _
        // Predicated region
        $region57: #{mixtral_sparse_moe.3} parent=39 // pred_check
          %p406 = pneg %p400
        $region58: #{mixtral_sparse_moe.3} parent=39 // pred_check_branch
          %408 = sbr.rel (%p406) target = $region60
        $region59: #{mixtral_sparse_moe.3} parent=39 // pred_region
          %409 = vst [vmem:[#allocation3] sm:$0xff] 0.0
        $region60: #{mixtral_sparse_moe.3} parent=39 // pred_fallthru
          _
        %v410 = vld [vmem:[%s388] sm:$0xf]
        %v411 = vld [vmem:[%s318] sm:$0xf]
        %v412 = vld [vmem:[%s318 + $0x4] sm:$0xf]
        %v413 = vld [vmem:[%s318 + $0x8] sm:$0xf]
        %v414 = vld [vmem:[%s318 + $0xc] sm:$0xf]
        %v415 = vld [vmem:[%s318 + $0x10] sm:$0xf]
        %v416 = vld [vmem:[%s318 + $0x14] sm:$0xf]
        %v417 = vld [vmem:[%s318 + $0x18] sm:$0xf]
        %v418 = vld [vmem:[%s318 + $0x1c] sm:$0xf]
        %v419 = vld [vmem:[%s318 + $0x20] sm:$0xf]
        %v420 = vld [vmem:[%s318 + $0x24] sm:$0xf]
        %v421 = vld [vmem:[%s318 + $0x28] sm:$0xf]
        %v422 = vld [vmem:[%s318 + $0x2c] sm:$0xf]
        %v423 = vld [vmem:[%s318 + $0x30] sm:$0xf]
        %v424 = vld [vmem:[%s318 + $0x34] sm:$0xf]
        %v425 = vld [vmem:[%s318 + $0x38] sm:$0xf]
        %v426 = vld [vmem:[%s318 + $0x3c] sm:$0xf]
        %v443 = vunpack.c.l.b16 %v411
        %v444 = vunpack.c.l.b16 %v412
        %v445 = vunpack.c.l.b16 %v413
        %v446 = vunpack.c.l.b16 %v414
        %v447 = vunpack.c.l.b16 %v415
        %v448 = vunpack.c.l.b16 %v416
        %v449 = vunpack.c.l.b16 %v417
        %v450 = vunpack.c.l.b16 %v418
        %v451 = vunpack.c.l.b16 %v419
        %v452 = vunpack.c.l.b16 %v420
        %v453 = vunpack.c.l.b16 %v421
        %v454 = vunpack.c.l.b16 %v422
        %v455 = vunpack.c.l.b16 %v423
        %v456 = vunpack.c.l.b16 %v424
        %v457 = vunpack.c.l.b16 %v425
        %v458 = vunpack.c.l.b16 %v426
        %v459 = vpack.c.b16 %v444, %v443
        %v460 = vpack.c.b16 %v446, %v445
        %v461 = vpack.c.b16 %v448, %v447
        %v462 = vpack.c.b16 %v450, %v449
        %v463 = vpack.c.b16 %v452, %v451
        %v464 = vpack.c.b16 %v454, %v453
        %v465 = vpack.c.b16 %v456, %v455
        %v466 = vpack.c.b16 %v458, %v457
        %475 = vmatprep.subr.bf16.mxu0 0
        %476 = vmatpush1.bf16.msra.mxu0 %v466
        %477 = vmatprep.subr.bf16.mxu0 0
        %478 = vmatpush1.bf16.msra.mxu0 %v465
        %479 = vmatprep.subr.bf16.mxu0 0
        %480 = vmatpush1.bf16.msra.mxu0 %v464
        %481 = vmatprep.subr.bf16.mxu0 0
        %482 = vmatpush1.bf16.msra.mxu0 %v463
        %483 = vmatprep.subr.bf16.mxu0 0
        %484 = vmatpush1.bf16.msra.mxu0 %v462
        %485 = vmatprep.subr.bf16.mxu0 0
        %486 = vmatpush1.bf16.msra.mxu0 %v461
        %487 = vmatprep.subr.bf16.mxu0 0
        %488 = vmatpush1.bf16.msra.mxu0 %v460
        %489 = vmatprep.subr.bf16.mxu0 0
        %490 = vmatpush1.bf16.msra.mxu0 %v459
        %491 = vmatprep.subr.bf16.mxu0 0
        %492 = vmatpush2.bf16.msra.mxu0 0
        %493 = vmatprep.subr.bf16.mxu0 0
        %494 = vmatpush2.bf16.msra.mxu0 0
        %495 = vmatprep.subr.bf16.mxu0 0
        %496 = vmatpush2.bf16.msra.mxu0 0
        %497 = vmatprep.subr.bf16.mxu0 0
        %498 = vmatpush2.bf16.msra.mxu0 0
        %499 = vmatprep.subr.bf16.mxu0 0
        %500 = vmatpush2.bf16.msra.mxu0 0
        %501 = vmatprep.subr.bf16.mxu0 0
        %502 = vmatpush2.bf16.msra.mxu0 0
        %503 = vmatprep.subr.bf16.mxu0 0
        %504 = vmatpush2.bf16.msra.mxu0 0
        %505 = vmatprep.subr.bf16.mxu0 0
        %506 = vmatpush2.bf16.msra.mxu0 0
        %507 = vmatprep.mubr.bf16.mxu0 0
        %508 = vmatmul.mubr.bf16.gmra.mxu0 %v410
        %v509 = vpop.f32.mrf.mxu0
        %v510 = vadd.f32 0.0, %v509
        %v511 = vpop.f32.mrf.mxu0
        %v512 = vpop.f32.mrf.mxu0
        %v513 = vpop.f32.mrf.mxu0
        %514 = vdwg.mxu0
        %v515 = vld [vmem:[%s327] sm:$0xf]
        %v516 = vld [vmem:[%s327 + $0x4] sm:$0xf]
        %v517 = vld [vmem:[%s327 + $0x8] sm:$0xf]
        %v518 = vld [vmem:[%s327 + $0xc] sm:$0xf]
        %v519 = vld [vmem:[%s327 + $0x10] sm:$0xf]
        %v520 = vld [vmem:[%s327 + $0x14] sm:$0xf]
        %v521 = vld [vmem:[%s327 + $0x18] sm:$0xf]
        %v522 = vld [vmem:[%s327 + $0x1c] sm:$0xf]
        %v523 = vld [vmem:[%s327 + $0x20] sm:$0xf]
        %v524 = vld [vmem:[%s327 + $0x24] sm:$0xf]
        %v525 = vld [vmem:[%s327 + $0x28] sm:$0xf]
        %v526 = vld [vmem:[%s327 + $0x2c] sm:$0xf]
        %v527 = vld [vmem:[%s327 + $0x30] sm:$0xf]
        %v528 = vld [vmem:[%s327 + $0x34] sm:$0xf]
        %v529 = vld [vmem:[%s327 + $0x38] sm:$0xf]
        %v530 = vld [vmem:[%s327 + $0x3c] sm:$0xf]
        %v547 = vunpack.c.l.b16 %v515
        %v548 = vunpack.c.l.b16 %v516
        %v549 = vunpack.c.l.b16 %v517
        %v550 = vunpack.c.l.b16 %v518
        %v551 = vunpack.c.l.b16 %v519
        %v552 = vunpack.c.l.b16 %v520
        %v553 = vunpack.c.l.b16 %v521
        %v554 = vunpack.c.l.b16 %v522
        %v555 = vunpack.c.l.b16 %v523
        %v556 = vunpack.c.l.b16 %v524
        %v557 = vunpack.c.l.b16 %v525
        %v558 = vunpack.c.l.b16 %v526
        %v559 = vunpack.c.l.b16 %v527
        %v560 = vunpack.c.l.b16 %v528
        %v561 = vunpack.c.l.b16 %v529
        %v562 = vunpack.c.l.b16 %v530
        %v563 = vpack.c.b16 %v548, %v547
        %v564 = vpack.c.b16 %v550, %v549
        %v565 = vpack.c.b16 %v552, %v551
        %v566 = vpack.c.b16 %v554, %v553
        %v567 = vpack.c.b16 %v556, %v555
        %v568 = vpack.c.b16 %v558, %v557
        %v569 = vpack.c.b16 %v560, %v559
        %v570 = vpack.c.b16 %v562, %v561
        %579 = vmatprep.subr.bf16.mxu0 0
        %580 = vmatpush1.bf16.msra.mxu0 %v570
        %581 = vmatprep.subr.bf16.mxu0 0
        %582 = vmatpush1.bf16.msra.mxu0 %v569
        %583 = vmatprep.subr.bf16.mxu0 0
        %584 = vmatpush1.bf16.msra.mxu0 %v568
        %585 = vmatprep.subr.bf16.mxu0 0
        %586 = vmatpush1.bf16.msra.mxu0 %v567
        %587 = vmatprep.subr.bf16.mxu0 0
        %588 = vmatpush1.bf16.msra.mxu0 %v566
        %589 = vmatprep.subr.bf16.mxu0 0
        %590 = vmatpush1.bf16.msra.mxu0 %v565
        %591 = vmatprep.subr.bf16.mxu0 0
        %592 = vmatpush1.bf16.msra.mxu0 %v564
        %593 = vmatprep.subr.bf16.mxu0 0
        %594 = vmatpush1.bf16.msra.mxu0 %v563
        %595 = vmatprep.subr.bf16.mxu0 0
        %596 = vmatpush2.bf16.msra.mxu0 0
        %597 = vmatprep.subr.bf16.mxu0 0
        %598 = vmatpush2.bf16.msra.mxu0 0
        %599 = vmatprep.subr.bf16.mxu0 0
        %600 = vmatpush2.bf16.msra.mxu0 0
        %601 = vmatprep.subr.bf16.mxu0 0
        %602 = vmatpush2.bf16.msra.mxu0 0
        %603 = vmatprep.subr.bf16.mxu0 0
        %604 = vmatpush2.bf16.msra.mxu0 0
        %605 = vmatprep.subr.bf16.mxu0 0
        %606 = vmatpush2.bf16.msra.mxu0 0
        %607 = vmatprep.subr.bf16.mxu0 0
        %608 = vmatpush2.bf16.msra.mxu0 0
        %609 = vmatprep.subr.bf16.mxu0 0
        %610 = vmatpush2.bf16.msra.mxu0 0
        %611 = vmatprep.mubr.bf16.mxu0 0
        %612 = vmatmul.mubr.bf16.gmra.mxu0 %v410
        %v613 = vpop.f32.mrf.mxu0
        %v614 = vadd.f32 0.0, %v613
        %v615 = vpop.f32.mrf.mxu0
        %v616 = vpop.f32.mrf.mxu0
        %v617 = vpop.f32.mrf.mxu0
        %618 = vdwg.mxu0
        %v619 = vxor.u32 %v510, 2147483648
        %v620 = vmul.f32 %v619, 1.442695
        %v621 = vpow.pop %v620
        %v622 = vadd.f32 %v621, 1.0
        %v623 = vrcp.pop %v622
        %v624 = vmul.f32 1.0, %v623
        %v625 = vmul.f32 %v510, %v624
        %v626 = vmul.f32 %v625, %v614
        %v627 = vld [vmem:[#allocation3] sm:$0xff]
        %v628 = vpack.c.bf16 %v626, %v626
        %v629 = vld [vmem:[%s336] sm:$0xf]
        %v630 = vld [vmem:[%s336 + $0x4] sm:$0xf]
        %v631 = vld [vmem:[%s336 + $0x8] sm:$0xf]
        %v632 = vld [vmem:[%s336 + $0xc] sm:$0xf]
        %v633 = vld [vmem:[%s336 + $0x10] sm:$0xf]
        %v634 = vld [vmem:[%s336 + $0x14] sm:$0xf]
        %v635 = vld [vmem:[%s336 + $0x18] sm:$0xf]
        %v636 = vld [vmem:[%s336 + $0x1c] sm:$0xf]
        %v637 = vld [vmem:[%s336 + $0x20] sm:$0xf]
        %v638 = vld [vmem:[%s336 + $0x24] sm:$0xf]
        %v639 = vld [vmem:[%s336 + $0x28] sm:$0xf]
        %v640 = vld [vmem:[%s336 + $0x2c] sm:$0xf]
        %v641 = vld [vmem:[%s336 + $0x30] sm:$0xf]
        %v642 = vld [vmem:[%s336 + $0x34] sm:$0xf]
        %v643 = vld [vmem:[%s336 + $0x38] sm:$0xf]
        %v644 = vld [vmem:[%s336 + $0x3c] sm:$0xf]
        %v661 = vunpack.c.l.b16 %v629
        %v662 = vunpack.c.l.b16 %v630
        %v663 = vunpack.c.l.b16 %v631
        %v664 = vunpack.c.l.b16 %v632
        %v665 = vunpack.c.l.b16 %v633
        %v666 = vunpack.c.l.b16 %v634
        %v667 = vunpack.c.l.b16 %v635
        %v668 = vunpack.c.l.b16 %v636
        %v669 = vunpack.c.l.b16 %v637
        %v670 = vunpack.c.l.b16 %v638
        %v671 = vunpack.c.l.b16 %v639
        %v672 = vunpack.c.l.b16 %v640
        %v673 = vunpack.c.l.b16 %v641
        %v674 = vunpack.c.l.b16 %v642
        %v675 = vunpack.c.l.b16 %v643
        %v676 = vunpack.c.l.b16 %v644
        %v677 = vpack.c.b16 %v662, %v661
        %v678 = vpack.c.b16 %v664, %v663
        %v679 = vpack.c.b16 %v666, %v665
        %v680 = vpack.c.b16 %v668, %v667
        %v681 = vpack.c.b16 %v670, %v669
        %v682 = vpack.c.b16 %v672, %v671
        %v683 = vpack.c.b16 %v674, %v673
        %v684 = vpack.c.b16 %v676, %v675
        %693 = vmatprep.subr.bf16.mxu0 0
        %694 = vmatpush1.bf16.msra.mxu0 %v684
        %695 = vmatprep.subr.bf16.mxu0 0
        %696 = vmatpush1.bf16.msra.mxu0 %v683
        %697 = vmatprep.subr.bf16.mxu0 0
        %698 = vmatpush1.bf16.msra.mxu0 %v682
        %699 = vmatprep.subr.bf16.mxu0 0
        %700 = vmatpush1.bf16.msra.mxu0 %v681
        %701 = vmatprep.subr.bf16.mxu0 0
        %702 = vmatpush1.bf16.msra.mxu0 %v680
        %703 = vmatprep.subr.bf16.mxu0 0
        %704 = vmatpush1.bf16.msra.mxu0 %v679
        %705 = vmatprep.subr.bf16.mxu0 0
        %706 = vmatpush1.bf16.msra.mxu0 %v678
        %707 = vmatprep.subr.bf16.mxu0 0
        %708 = vmatpush1.bf16.msra.mxu0 %v677
        %709 = vmatprep.subr.bf16.mxu0 0
        %710 = vmatpush2.bf16.msra.mxu0 0
        %711 = vmatprep.subr.bf16.mxu0 0
        %712 = vmatpush2.bf16.msra.mxu0 0
        %713 = vmatprep.subr.bf16.mxu0 0
        %714 = vmatpush2.bf16.msra.mxu0 0
        %715 = vmatprep.subr.bf16.mxu0 0
        %716 = vmatpush2.bf16.msra.mxu0 0
        %717 = vmatprep.subr.bf16.mxu0 0
        %718 = vmatpush2.bf16.msra.mxu0 0
        %719 = vmatprep.subr.bf16.mxu0 0
        %720 = vmatpush2.bf16.msra.mxu0 0
        %721 = vmatprep.subr.bf16.mxu0 0
        %722 = vmatpush2.bf16.msra.mxu0 0
        %723 = vmatprep.subr.bf16.mxu0 0
        %724 = vmatpush2.bf16.msra.mxu0 0
        %725 = vmatprep.mubr.bf16.mxu0 0
        %726 = vmatmul.mubr.bf16.gmra.mxu0 %v628
        %v727 = vpop.f32.mrf.mxu0
        %v728 = vadd.f32 0.0, %v727
        %v729 = vpop.f32.mrf.mxu0
        %v730 = vpop.f32.mrf.mxu0
        %v731 = vpop.f32.mrf.mxu0
        %732 = vdwg.mxu0
        %v733 = vadd.f32 %v627, %v728
        %734 = vst [vmem:[#allocation3] sm:$0xff] %v733
        %p735 = scmp.eq.s32.totalorder %s32, 1
        // Predicated region
        $region61: #{mixtral_sparse_moe.3} parent=39 // pred_check
          %p736 = pneg %p735
        $region62: #{mixtral_sparse_moe.3} parent=39 // pred_check_branch
          %738 = sbr.rel (%p736) target = $region64
        $region63: #{mixtral_sparse_moe.3} parent=39 // pred_region
          %v739 = vld [vmem:[#allocation2] sm:$0xff]
          %v740 = vld [vmem:[%s396] sm:$0xff]
          %v741 = vld [vmem:[#allocation3] sm:$0xff]
          %743 = vset.pattern.permute.xlu0 0
          %744 = vperm.xlu0 %743, %v740
          %v745 = vpop.permute.xlu0 %744
          %v747 = vmul.f32 %v745, %v741
          %v748 = vadd.f32 %v739, %v747
          %749 = vst [vmem:[#allocation2] sm:$0xff] %v748
        $region64: #{mixtral_sparse_moe.3} parent=39 // pred_fallthru
          _
        %p750 = scmp.eq.s32.totalorder %s31, 7
        %p751 = pnand %p750, %p735
        %p752 = pneg %p751
        // Predicated region
        $region65: #{mixtral_sparse_moe.3} parent=39 // pred_check
          _
        $region66: #{mixtral_sparse_moe.3} parent=39 // pred_check_branch
          %754 = sbr.rel (%p751) target = $region68
        $region67: #{mixtral_sparse_moe.3} parent=39 // pred_region
          %v755 = vld [vmem:[#allocation2] sm:$0xff]
          %v756 = vpack.c.bf16 %v755, %v755
          %757 = vst [vmem:[%s384] sm:$0xf] %v756
        $region68: #{mixtral_sparse_moe.3} parent=39 // pred_fallthru
          _
        %s758 = sand.u32 %s190, 1
        %s759 = scalar_lea.sflag [#allocation6], %s758
        %s760 = sand.u32 %s190, 1
        %s761 = smul.addr %s760, 4
        %s762 = scalar_lea.vmem [#allocation10], %s761
        // Predicated region
        $region69: #{mixtral_sparse_moe.3} parent=39 // pred_check
          %p763 = pneg %p200
        $region70: #{mixtral_sparse_moe.3} parent=39 // pred_check_branch
          %765 = sbr.rel (%p763) target = $region72
        $region71: #{mixtral_sparse_moe.3} parent=39 // pred_region
          %s767 = ssub.s32 64, 64
          %768 = vsyncadd %s759, %s767
          %s769 = smul.addr %s30, 64
          %s770 = scalar_lea.hbm %s5, %s769
          %s772 = sshll.u32 %s762, 4
          %s773 = int_to_ptr.vmem [resolvable:$true] %s772
          %775 = dma.vmem_to_hbm [thread:$0]  %s773, 64, %s770, %s759
        $region72: #{mixtral_sparse_moe.3} parent=39 // pred_fallthru
          _
      $region40: #{mixtral_sparse_moe.3} parent=5 // pred_fallthru
        _
      %p776 = scmp.le.s32.totalorder 2, %s20
      // Predicated region
      $region73: #{mixtral_sparse_moe.3} parent=5 // pred_check
        %p777 = pneg %p776
      $region74: #{mixtral_sparse_moe.3} parent=5 // pred_check_branch
        %779 = sbr.rel (%p777) target = $region76
      $region75: #{mixtral_sparse_moe.3} parent=5 // pred_region
        %s780 = ssub.s32 %s20, 2
        // Predicated region
        $region77: #{mixtral_sparse_moe.3} parent=75 // pred_check
          %p781 = pneg %p206
        $region78: #{mixtral_sparse_moe.3} parent=75 // pred_check_branch
          %783 = sbr.rel (%p781) target = $region80
        $region79: #{mixtral_sparse_moe.3} parent=75 // pred_region
          %s784 = sand.u32 %s191, 1
          %s785 = scalar_lea.sflag [#allocation6], %s784
          %s786 = sand.u32 %s191, 1
          %s787 = smul.addr %s786, 4
          %s788 = scalar_lea.vmem [#allocation10], %s787
          %789 = dma.done %s785, 64
        $region80: #{mixtral_sparse_moe.3} parent=75 // pred_fallthru
          _
      $region76: #{mixtral_sparse_moe.3} parent=5 // pred_fallthru
        _
    $region6: #{mixtral_sparse_moe.3} parent=1 // loop_footer
      %s24 = sadd.s32 1, %s20
    $region7: #{mixtral_sparse_moe.3} parent=1 // loop_footer_branch
      %19 = sbr.rel target = $region3
    $region8: #{mixtral_sparse_moe.3} parent=1 // loop_exit
      _
    %790 = vsyncpa [#allocation5], 1
    %s791 = scalar_lea.sflag [#allocation5], 1
    %792 = vsyncpa %s791, 1
    %793 = vsyncpa [#allocation8], 1
    %s794 = scalar_lea.sflag [#allocation8], 1
    %795 = vsyncpa %s794, 1
    %796 = vsyncpa [#allocation6], 1
    %s797 = scalar_lea.sflag [#allocation6], 1
    %798 = vsyncpa %s797, 1

</llo_original>
